<compile_context>
chip_gen: v6e
topology: v6e:2x2x1
jax: 0.10.0
libtpu: 0.0.40
codegen_flags: <defaults>
</compile_context>

<pallas_src>
import jax
import jax.numpy as jnp
from jax import lax
from jax.experimental import pallas as pl
from jax.experimental.pallas import tpu as pltpu

_LANE = 128


def _up_phase_conv_kernel(x_ref, w_ref, b_ref, o_ref):
    """One (batch, cout-tile, row-band) grid step.

    x_ref : (Hp+2, W+2, Cp)  zero-padded image (resident across co / band)
    w_ref : (4, 4*Cp, TCo)   per-phase fused 2x2 taps, [phase, 4*Cin, Cout]
    b_ref : (1, TCo)         conv bias (f32)
    o_ref : (4, TH, W, TCo)  output band, phase-major
    """
    _, TH, W, TCo = o_ref.shape
    Cp = x_ref.shape[-1]
    band = pl.program_id(2)
    row0 = pl.multiple_of(band * TH, TH)

    # Rows [row0, row0 + TH + 2) of the padded image cover this band + halo.
    xp = x_ref[pl.ds(row0, TH + 2), :, :]               # (TH+2, W+2, Cp)
    bias = b_ref[...]                                    # (1, TCo), f32

    # Four output phases; each is ONE bf16 matmul over the 4 shifted taps
    # fused along Cin (K = 4*Cp), accumulated in f32 on the MXU.  Only one
    # concatenated slab + one accumulator is live at a time and each phase
    # result is stored (dense, lane-aligned) immediately.
    for di in range(2):
        for dj in range(2):
            p = 2 * di + dj
            parts = [xp[di + rh:di + rh + TH, dj + rw:dj + rw + W, :]
                     for rh in range(2) for rw in range(2)]   # 4 x (TH,W,Cp)
            xcat = jnp.concatenate(parts, axis=-1)            # (TH, W, 4*Cp)
            xcat = xcat.reshape(TH * W, 4 * Cp)
            acc = jnp.dot(xcat, w_ref[p],
                          preferred_element_type=jnp.float32)  # (TH*W, TCo)
            acc = acc + bias
            o_ref[p] = acc.reshape(TH, W, TCo).astype(o_ref.dtype)


def _round_up(n, m):
    return ((n + m - 1) // m) * m


def up_forward(x_nchw, w_oihw, bias, *, band_rows=None, cout_tile=256,
               compute_dtype=None):
    """Up block forward: NCHW in -> NCHW out (spatial doubled)."""
    N, C, H, W = x_nchw.shape
    out_dtype = x_nchw.dtype
    if compute_dtype is None:
        compute_dtype = (jnp.bfloat16 if x_nchw.dtype == jnp.float32
                         else x_nchw.dtype)

    # Lane-dense channel padding (no-op when C is already a 128-multiple).
    Cp = _round_up(max(C, _LANE), _LANE)

    # Cout tile: the largest 128-multiple dividing Cp, capped at cout_tile.
    TCo = _LANE
    for t in range(_LANE, min(cout_tile, Cp) + 1, _LANE):
        if Cp % t == 0:
            TCo = t
    NCo = Cp // TCo

    # Row bands: target matmul M = TH*W ~ 2048; ragged H handled by padding
    # rows to Hp = NB*TH and slicing the result back (no divisor fallback).
    if band_rows is None:
        band_rows = max(8, -(-2048 // W))
    TH = max(1, min(int(band_rows), H))
    NB = -(-H // TH)
    Hp = NB * TH

    # ---- wrapper-side prep (all on the 1x-sized tensors) ----
    x_nhwc = jnp.transpose(x_nchw, (0, 2, 3, 1)).astype(compute_dtype)
    x_pad = jnp.pad(x_nhwc,
                    ((0, 0), (1, 1 + Hp - H), (1, 1), (0, Cp - C)))

    # Effective 2x2 taps per output phase (nearest-upsample folded into the
    # conv), fused along Cin so each phase is a single K=4*Cp matmul.
    w_hwio = jnp.transpose(w_oihw.astype(jnp.float32), (2, 3, 1, 0))  # (3,3,Ci,Co)
    row_sets = (((0,), (1, 2)), ((0, 1), (2,)))   # [di][rh] -> contributing kh
    col_sets = row_sets                           # [dj][rw] -> contributing kw
    phase_w = []
    for di in range(2):
        for dj in range(2):
            taps = []
            for rh in range(2):
                for rw in range(2):
                    tap = sum(w_hwio[kh, kw]
                              for kh in row_sets[di][rh]
                              for kw in col_sets[dj][rw])            # (C, C)
                    taps.append(jnp.pad(tap, ((0, Cp - C), (0, Cp - C))))
            phase_w.append(jnp.concatenate(taps, axis=0))            # (4*Cp,Cp)
    w_cat = jnp.stack(phase_w, axis=0).astype(compute_dtype)         # (4,4Cp,Cp)
    b2d = jnp.pad(bias.astype(jnp.float32), (0, Cp - C)).reshape(1, Cp)

    # ---- VMEM budget & advisory cost ----
    cb = jnp.dtype(compute_dtype).itemsize
    ob = jnp.dtype(out_dtype).itemsize
    blk = (2 * (Hp + 2) * (W + 2) * Cp * cb       # resident image (2 buffers)
           + 2 * 16 * Cp * TCo * cb               # fused weight tile
           + 2 * Cp * 4                           # bias
           + 2 * 4 * TH * W * TCo * ob)           # output band
    tmp = TH * W * (4 * Cp) * cb + TH * W * TCo * 4 + (TH + 2) * (W + 2) * Cp * cb
    vmem_limit = int(min(128 * 1024 * 1024,
                         max(2 * (blk + tmp), 32 * 1024 * 1024)))

    cost = pl.CostEstimate(
        flops=int(2 * N * 4 * Hp * W * 4 * Cp * Cp),
        transcendentals=0,
        bytes_accessed=int(N * (Hp + 2) * (W + 2) * Cp * cb
                           + N * 16 * Cp * Cp * cb
                           + N * 4 * Hp * W * Cp * ob + 4 * Cp),
    )

    out5 = pl.pallas_call(
        _up_phase_conv_kernel,
        out_shape=jax.ShapeDtypeStruct((N, 4, Hp, W, Cp), out_dtype),
        grid_spec=pltpu.PrefetchScalarGridSpec(
            num_scalar_prefetch=0,
            grid=(N, NCo, NB),                    # band innermost
            in_specs=[
                # Whole padded image per batch; block index ignores co/band so
                # it is DMA'd once per image and stays resident in VMEM.
                pl.BlockSpec((pl.Squeezed(), Hp + 2, W + 2, Cp),
                             lambda n, co, b: (n, 0, 0, 0)),
                pl.BlockSpec((4, 4 * Cp, TCo), lambda n, co, b: (0, 0, co)),
                pl.BlockSpec((1, TCo), lambda n, co, b: (0, co)),
            ],
            out_specs=pl.BlockSpec((pl.Squeezed(), 4, TH, W, TCo),
                                   lambda n, co, b: (n, 0, b, 0, co)),
        ),
        compiler_params=pltpu.CompilerParams(
            dimension_semantics=("parallel", "arbitrary", "arbitrary"),
            vmem_limit_bytes=vmem_limit),
        cost_estimate=cost,
    )(x_pad, w_cat, b2d)                                   # (N, 4, Hp, W, Cp)

    # Drop row / channel padding, interleave phases, convert to NCHW.
    # TODO(synk): if the surrounding DiT graph is channels-last, return NHWC
    #             here and drop this full-tensor relayout.
    out5 = out5[:, :, :H, :, :C]                           # (N, 4, H, W, C)
    out6 = out5.reshape(N, 2, 2, H, W, C)                  # [n, di, dj, i, j, c]
    out = jnp.transpose(out6, (0, 5, 3, 1, 4, 2))          # (n, c, i, di, j, dj)
    return out.reshape(N, C, 2 * H, 2 * W)


def _reference(x_nchw, w_oihw, bias):
    """Plain-JAX reference: nearest upsample x2 + 3x3 SAME conv (NCHW)."""
    x_up = jnp.repeat(jnp.repeat(x_nchw, 2, axis=2), 2, axis=3)
    y = lax.conv_general_dilated(
        x_up, w_oihw, window_strides=(1, 1), padding="SAME",
        dimension_numbers=("NCHW", "OIHW", "NCHW"))
    return y + bias[None, :, None, None]


if __name__ == "__main__":
    N, C, H, W = 2, 4, 16, 16

    key = jax.random.PRNGKey(0)
    kx, kw, kb = jax.random.split(key, 3)
    x = jax.random.normal(kx, (N, C, H, W), dtype=jnp.float32)
    # Deterministic synthetic Conv2d(C, C, 3, padding=1) parameters (OIHW).
    w = 0.1 * jax.random.normal(kw, (C, C, 3, 3), dtype=jnp.float32)
    b = 0.1 * jax.random.normal(kb, (C,), dtype=jnp.float32)

    out = up_forward(x, w, b, band_rows=8)   # 2 row-bands -> exercises banding
    out = jax.block_until_ready(out)

    ref = _reference(x, w, b)
    assert out.shape == (N, C, 2 * H, 2 * W), out.shape
    # bf16 MXU feeds with f32 accumulation -> bf16-level tolerance vs f32 ref.
    err = float(jnp.max(jnp.abs(out - ref)))
    assert err < 5e-2, err

    print("KERNEL_OK")
</pallas_src>

<mosaic_0001>
module attributes {stable_mosaic.version = 11 : i64} {
  func.func @_up_phase_conv_kernel(%arg0: i32, %arg1: i32, %arg2: i32, %arg3: memref<1x18x18x128xbf16, #tpu.memory_space<vmem>>, %arg4: memref<4x512x128xbf16, #tpu.memory_space<vmem>>, %arg5: memref<1x128xf32, #tpu.memory_space<vmem>>, %arg6: memref<1x4x8x16x128xf32, #tpu.memory_space<vmem>>) attributes {dimension_semantics = [#tpu.dimension_semantics<parallel>, #tpu.dimension_semantics<arbitrary>, #tpu.dimension_semantics<arbitrary>], iteration_bounds = array<i64: 2, 1, 2>, scalar_prefetch = 0 : i64, scratch_operands = 0 : i64, tpu.core_type = #tpu.core_type<tc>, window_params = [{transform_indices = @transform_0, window_bounds = array<i64: 1, 18, 18, 128>}, {transform_indices = @transform_1, window_bounds = array<i64: 4, 512, 128>}, {transform_indices = @transform_2, window_bounds = array<i64: 1, 128>}, {transform_indices = @transform_3, window_bounds = array<i64: 1, 4, 8, 16, 128>}]} {
    %c8_i32 = arith.constant 8 : i32
    %0 = arith.muli %arg2, %c8_i32 : i32
    %1 = tpu.assume_multiple %0, 8 : i32
    %c0 = arith.constant 0 : index
    %2 = arith.index_cast %1 : i32 to index
    %c0_0 = arith.constant 0 : index
    %c0_1 = arith.constant 0 : index
    %3 = vector.load %arg3[%c0, %2, %c0_0, %c0_1] : memref<1x18x18x128xbf16, #tpu.memory_space<vmem>>, vector<1x10x18x128xbf16>
    %4 = vector.shape_cast %3 : vector<1x10x18x128xbf16> to vector<10x18x128xbf16>
    %c0_2 = arith.constant 0 : index
    %c0_3 = arith.constant 0 : index
    %5 = vector.load %arg5[%c0_2, %c0_3] : memref<1x128xf32, #tpu.memory_space<vmem>>, vector<1x128xf32>
    %6 = vector.extract_strided_slice %4 {offsets = [0, 0, 0], sizes = [8, 16, 128], strides = [1, 1, 1]} : vector<10x18x128xbf16> to vector<8x16x128xbf16>
    %7 = vector.extract_strided_slice %4 {offsets = [0, 1, 0], sizes = [8, 16, 128], strides = [1, 1, 1]} : vector<10x18x128xbf16> to vector<8x16x128xbf16>
    %8 = vector.extract_strided_slice %4 {offsets = [1, 0, 0], sizes = [8, 16, 128], strides = [1, 1, 1]} : vector<10x18x128xbf16> to vector<8x16x128xbf16>
    %9 = vector.extract_strided_slice %4 {offsets = [1, 1, 0], sizes = [8, 16, 128], strides = [1, 1, 1]} : vector<10x18x128xbf16> to vector<8x16x128xbf16>
    %10 = tpu.concatenate %6, %7, %8, %9 in 2 : vector<8x16x128xbf16>, vector<8x16x128xbf16>, vector<8x16x128xbf16>, vector<8x16x128xbf16> -> vector<8x16x512xbf16>
    %11 = vector.shape_cast %10 : vector<8x16x512xbf16> to vector<128x512xbf16>
    %c0_4 = arith.constant 0 : index
    %c0_5 = arith.constant 0 : index
    %c0_6 = arith.constant 0 : index
    %12 = vector.load %arg4[%c0_4, %c0_5, %c0_6] : memref<4x512x128xbf16, #tpu.memory_space<vmem>>, vector<1x512x128xbf16>
    %13 = vector.shape_cast %12 : vector<1x512x128xbf16> to vector<512x128xbf16>
    %cst = arith.constant dense<0.000000e+00> : vector<128x128xf32>
    %14 = tpu.matmul %11, %13, %cst {dimension_numbers = #tpu.dot_dimension_numbers<[1], [0], [0], [1], [0, 0, 1, 1], [], []>} : vector<128x512xbf16>, vector<512x128xbf16>, vector<128x128xf32> -> vector<128x128xf32>
    %15 = vector.broadcast %5 : vector<1x128xf32> to vector<128x128xf32>
    %16 = arith.addf %14, %15 : vector<128x128xf32>
    %17 = vector.shape_cast %16 : vector<128x128xf32> to vector<8x16x128xf32>
    %c0_7 = arith.constant 0 : index
    %c0_8 = arith.constant 0 : index
    %c0_9 = arith.constant 0 : index
    %c0_10 = arith.constant 0 : index
    %c0_11 = arith.constant 0 : index
    %18 = vector.load %arg6[%c0_7, %c0_8, %c0_9, %c0_10, %c0_11] : memref<1x4x8x16x128xf32, #tpu.memory_space<vmem>>, vector<1x1x8x16x128xf32>
    %19 = vector.shape_cast %18 : vector<1x1x8x16x128xf32> to vector<8x16x128xf32>
    %20 = vector.shape_cast %17 : vector<8x16x128xf32> to vector<1x1x8x16x128xf32>
    tpu.vector_store %arg6[%c0_7, %c0_8, %c0_9, %c0_10, %c0_11], %20 {strides = array<i32>} : memref<1x4x8x16x128xf32, #tpu.memory_space<vmem>>, vector<1x1x8x16x128xf32>,
    %21 = vector.extract_strided_slice %4 {offsets = [0, 1, 0], sizes = [8, 16, 128], strides = [1, 1, 1]} : vector<10x18x128xbf16> to vector<8x16x128xbf16>
    %22 = vector.extract_strided_slice %4 {offsets = [0, 2, 0], sizes = [8, 16, 128], strides = [1, 1, 1]} : vector<10x18x128xbf16> to vector<8x16x128xbf16>
    %23 = vector.extract_strided_slice %4 {offsets = [1, 1, 0], sizes = [8, 16, 128], strides = [1, 1, 1]} : vector<10x18x128xbf16> to vector<8x16x128xbf16>
    %24 = vector.extract_strided_slice %4 {offsets = [1, 2, 0], sizes = [8, 16, 128], strides = [1, 1, 1]} : vector<10x18x128xbf16> to vector<8x16x128xbf16>
    %25 = tpu.concatenate %21, %22, %23, %24 in 2 : vector<8x16x128xbf16>, vector<8x16x128xbf16>, vector<8x16x128xbf16>, vector<8x16x128xbf16> -> vector<8x16x512xbf16>
    %26 = vector.shape_cast %25 : vector<8x16x512xbf16> to vector<128x512xbf16>
    %c1 = arith.constant 1 : index
    %c0_12 = arith.constant 0 : index
    %c0_13 = arith.constant 0 : index
    %27 = vector.load %arg4[%c1, %c0_12, %c0_13] : memref<4x512x128xbf16, #tpu.memory_space<vmem>>, vector<1x512x128xbf16>
    %28 = vector.shape_cast %27 : vector<1x512x128xbf16> to vector<512x128xbf16>
    %cst_14 = arith.constant dense<0.000000e+00> : vector<128x128xf32>
    %29 = tpu.matmul %26, %28, %cst_14 {dimension_numbers = #tpu.dot_dimension_numbers<[1], [0], [0], [1], [0, 0, 1, 1], [], []>} : vector<128x512xbf16>, vector<512x128xbf16>, vector<128x128xf32> -> vector<128x128xf32>
    %30 = vector.broadcast %5 : vector<1x128xf32> to vector<128x128xf32>
    %31 = arith.addf %29, %30 : vector<128x128xf32>
    %32 = vector.shape_cast %31 : vector<128x128xf32> to vector<8x16x128xf32>
    %c0_15 = arith.constant 0 : index
    %c1_16 = arith.constant 1 : index
    %c0_17 = arith.constant 0 : index
    %c0_18 = arith.constant 0 : index
    %c0_19 = arith.constant 0 : index
    %33 = vector.load %arg6[%c0_15, %c1_16, %c0_17, %c0_18, %c0_19] : memref<1x4x8x16x128xf32, #tpu.memory_space<vmem>>, vector<1x1x8x16x128xf32>
    %34 = vector.shape_cast %33 : vector<1x1x8x16x128xf32> to vector<8x16x128xf32>
    %35 = vector.shape_cast %32 : vector<8x16x128xf32> to vector<1x1x8x16x128xf32>
    tpu.vector_store %arg6[%c0_15, %c1_16, %c0_17, %c0_18, %c0_19], %35 {strides = array<i32>} : memref<1x4x8x16x128xf32, #tpu.memory_space<vmem>>, vector<1x1x8x16x128xf32>,
    %36 = vector.extract_strided_slice %4 {offsets = [1, 0, 0], sizes = [8, 16, 128], strides = [1, 1, 1]} : vector<10x18x128xbf16> to vector<8x16x128xbf16>
    %37 = vector.extract_strided_slice %4 {offsets = [1, 1, 0], sizes = [8, 16, 128], strides = [1, 1, 1]} : vector<10x18x128xbf16> to vector<8x16x128xbf16>
    %38 = vector.extract_strided_slice %4 {offsets = [2, 0, 0], sizes = [8, 16, 128], strides = [1, 1, 1]} : vector<10x18x128xbf16> to vector<8x16x128xbf16>
    %39 = vector.extract_strided_slice %4 {offsets = [2, 1, 0], sizes = [8, 16, 128], strides = [1, 1, 1]} : vector<10x18x128xbf16> to vector<8x16x128xbf16>
    %40 = tpu.concatenate %36, %37, %38, %39 in 2 : vector<8x16x128xbf16>, vector<8x16x128xbf16>, vector<8x16x128xbf16>, vector<8x16x128xbf16> -> vector<8x16x512xbf16>
    %41 = vector.shape_cast %40 : vector<8x16x512xbf16> to vector<128x512xbf16>
    %c2 = arith.constant 2 : index
    %c0_20 = arith.constant 0 : index
    %c0_21 = arith.constant 0 : index
    %42 = vector.load %arg4[%c2, %c0_20, %c0_21] : memref<4x512x128xbf16, #tpu.memory_space<vmem>>, vector<1x512x128xbf16>
    %43 = vector.shape_cast %42 : vector<1x512x128xbf16> to vector<512x128xbf16>
    %cst_22 = arith.constant dense<0.000000e+00> : vector<128x128xf32>
    %44 = tpu.matmul %41, %43, %cst_22 {dimension_numbers = #tpu.dot_dimension_numbers<[1], [0], [0], [1], [0, 0, 1, 1], [], []>} : vector<128x512xbf16>, vector<512x128xbf16>, vector<128x128xf32> -> vector<128x128xf32>
    %45 = vector.broadcast %5 : vector<1x128xf32> to vector<128x128xf32>
    %46 = arith.addf %44, %45 : vector<128x128xf32>
    %47 = vector.shape_cast %46 : vector<128x128xf32> to vector<8x16x128xf32>
    %c0_23 = arith.constant 0 : index
    %c2_24 = arith.constant 2 : index
    %c0_25 = arith.constant 0 : index
    %c0_26 = arith.constant 0 : index
    %c0_27 = arith.constant 0 : index
    %48 = vector.load %arg6[%c0_23, %c2_24, %c0_25, %c0_26, %c0_27] : memref<1x4x8x16x128xf32, #tpu.memory_space<vmem>>, vector<1x1x8x16x128xf32>
    %49 = vector.shape_cast %48 : vector<1x1x8x16x128xf32> to vector<8x16x128xf32>
    %50 = vector.shape_cast %47 : vector<8x16x128xf32> to vector<1x1x8x16x128xf32>
    tpu.vector_store %arg6[%c0_23, %c2_24, %c0_25, %c0_26, %c0_27], %50 {strides = array<i32>} : memref<1x4x8x16x128xf32, #tpu.memory_space<vmem>>, vector<1x1x8x16x128xf32>,
    %51 = vector.extract_strided_slice %4 {offsets = [1, 1, 0], sizes = [8, 16, 128], strides = [1, 1, 1]} : vector<10x18x128xbf16> to vector<8x16x128xbf16>
    %52 = vector.extract_strided_slice %4 {offsets = [1, 2, 0], sizes = [8, 16, 128], strides = [1, 1, 1]} : vector<10x18x128xbf16> to vector<8x16x128xbf16>
    %53 = vector.extract_strided_slice %4 {offsets = [2, 1, 0], sizes = [8, 16, 128], strides = [1, 1, 1]} : vector<10x18x128xbf16> to vector<8x16x128xbf16>
    %54 = vector.extract_strided_slice %4 {offsets = [2, 2, 0], sizes = [8, 16, 128], strides = [1, 1, 1]} : vector<10x18x128xbf16> to vector<8x16x128xbf16>
    %55 = tpu.concatenate %51, %52, %53, %54 in 2 : vector<8x16x128xbf16>, vector<8x16x128xbf16>, vector<8x16x128xbf16>, vector<8x16x128xbf16> -> vector<8x16x512xbf16>
    %56 = vector.shape_cast %55 : vector<8x16x512xbf16> to vector<128x512xbf16>
    %c3 = arith.constant 3 : index
    %c0_28 = arith.constant 0 : index
    %c0_29 = arith.constant 0 : index
    %57 = vector.load %arg4[%c3, %c0_28, %c0_29] : memref<4x512x128xbf16, #tpu.memory_space<vmem>>, vector<1x512x128xbf16>
    %58 = vector.shape_cast %57 : vector<1x512x128xbf16> to vector<512x128xbf16>
    %cst_30 = arith.constant dense<0.000000e+00> : vector<128x128xf32>
    %59 = tpu.matmul %56, %58, %cst_30 {dimension_numbers = #tpu.dot_dimension_numbers<[1], [0], [0], [1], [0, 0, 1, 1], [], []>} : vector<128x512xbf16>, vector<512x128xbf16>, vector<128x128xf32> -> vector<128x128xf32>
    %60 = vector.broadcast %5 : vector<1x128xf32> to vector<128x128xf32>
    %61 = arith.addf %59, %60 : vector<128x128xf32>
    %62 = vector.shape_cast %61 : vector<128x128xf32> to vector<8x16x128xf32>
    %c0_31 = arith.constant 0 : index
    %c3_32 = arith.constant 3 : index
    %c0_33 = arith.constant 0 : index
    %c0_34 = arith.constant 0 : index
    %c0_35 = arith.constant 0 : index
    %63 = vector.load %arg6[%c0_31, %c3_32, %c0_33, %c0_34, %c0_35] : memref<1x4x8x16x128xf32, #tpu.memory_space<vmem>>, vector<1x1x8x16x128xf32>
    %64 = vector.shape_cast %63 : vector<1x1x8x16x128xf32> to vector<8x16x128xf32>
    %65 = vector.shape_cast %62 : vector<8x16x128xf32> to vector<1x1x8x16x128xf32>
    tpu.vector_store %arg6[%c0_31, %c3_32, %c0_33, %c0_34, %c0_35], %65 {strides = array<i32>} : memref<1x4x8x16x128xf32, #tpu.memory_space<vmem>>, vector<1x1x8x16x128xf32>,
    return
  }
  func.func @transform_0(%arg0: i32, %arg1: i32, %arg2: i32) -> (i32, i32, i32, i32) {
    %c0_i32 = arith.constant 0 : i32
    %c0_i32_0 = arith.constant 0 : i32
    %c0_i32_1 = arith.constant 0 : i32
    %c0_i32_2 = arith.constant 0 : i32
    return %arg0, %c0_i32, %c0_i32_0, %c0_i32_1 : i32, i32, i32, i32
  }
  func.func @transform_1(%arg0: i32, %arg1: i32, %arg2: i32) -> (i32, i32, i32) {
    %c0_i32 = arith.constant 0 : i32
    %c0_i32_0 = arith.constant 0 : i32
    %c0_i32_1 = arith.constant 0 : i32
    return %c0_i32, %c0_i32_0, %arg1 : i32, i32, i32
  }
  func.func @transform_2(%arg0: i32, %arg1: i32, %arg2: i32) -> (i32, i32) {
    %c0_i32 = arith.constant 0 : i32
    %c0_i32_0 = arith.constant 0 : i32
    return %c0_i32, %arg1 : i32, i32
  }
  func.func @transform_3(%arg0: i32, %arg1: i32, %arg2: i32) -> (i32, i32, i32, i32, i32) {
    %c0_i32 = arith.constant 0 : i32
    %c0_i32_0 = arith.constant 0 : i32
    %c0_i32_1 = arith.constant 0 : i32
    return %arg0, %c0_i32, %arg2, %c0_i32_0, %arg1 : i32, i32, i32, i32, i32
  }
}

</mosaic_0001>

<llo_original>
// kernel: tpu_custom_call.1
$region0: #{tpu_custom_call.1}
  #allocation0 [shape = 'u32[]', space=smem, size = 0x4, offset = 0x4, fixed_abs, tag = 'smem constant byte address 0x4 - core index']
  #allocation1 [shape = 'u32[144,128]{1,0:T(1,128)}', space=vmem, size = 0x12000, scoped, tag = 'internal scratch']
  #allocation6 [shape = 's32[]', space=sflag, size = 0x4, offset = 0, fixed_abs, tag = 'sflag constant byte address 0x0 - dummy sync flag']
  %s0 = inlined_call_operand.vmem [shape: bf16[2,18,18,128], index: 0, kind: input, shape index: {}]
  %s1 = inlined_call_operand.hbm [shape: bf16[4,512,128], index: 1, kind: input, shape index: {}]
  %s2 = inlined_call_operand.vmem [shape: f32[1,128], index: 2, kind: input, shape index: {}]
  %s3 = inlined_call_operand.hbm [shape: f32[2,4,16,16,128], index: 3, kind: output, shape index: {}]
  %s4 = sld [smem:[#allocation0]]
  $region49: #{tpu_custom_call.1} parent=0
    _
  %s6 = ssub.s32 1, %s4
  %s7 = scalar_select 0, %s6, %s4
  $region1: #{tpu_custom_call.1} parent=0
    #allocation2 [shape = 'u8[524288]{0}', space=vmem, size = 0x80000, scoped, tag = 'input window, operand 1, single buffered']
    #allocation3 [shape = 's32[2]{0}', space=sflag, size = 0x8, scoped, tag = 'scoped memory for tpu_custom_call.1']
    #allocation4 [shape = 's32[2]{0}', space=sflag, size = 0x8, scoped, tag = 'scoped memory for tpu_custom_call.1']
    #allocation5 [shape = 'u8[524288]{0}', space=vmem, size = 0x80000, scoped, tag = 'output window, operand 0']
    %8 = vsyncpa [#allocation3], 0
    %9 = vsyncpa [#allocation4], 0
    %s10 = scalar_lea.sflag [#allocation4], 1
    %11 = vsyncpa %s10, 0
    loop: start=0, step=1, limit=6
    $region2: #{tpu_custom_call.1} parent=1 // loop_pre_header
      _
    $region3: #{tpu_custom_call.1} parent=1 // loop_header
      %s13 = sphi 0, %s17
      %p14 = scmp.ge.s32.totalorder %s13, 6
      %s20 = sphi 0, %s39
      %s21 = sphi 0, %s35
      %s22 = sphi 0, %s31
      %s23 = sphi 0, %s20
      %s24 = sphi 0, %s21
      %s25 = sphi 0, %s22
      %s26 = sphi 0, %s23
      %s27 = sphi 0, %s24
      %s28 = sphi 0, %s25
      %s42 = sphi 0, %s44
      %s45 = sphi 0, %s42
      %s46 = sphi 0, %s45
      %s62 = sphi 0, %s46
      %s68 = sphi 0, %s70
      %s71 = sphi 0, %s68
      %s72 = sphi 0, %s71
      %s88 = sphi 0, %s72
      %s94 = sphi 0, %s96
      %s97 = sphi 0, %s94
      %s98 = sphi 0, %s97
      %s114 = sphi 0, %s98
      %s124 = sphi 0, %s126
      %s127 = sphi 0, %s124
      %s128 = sphi 0, %s127
      %s144 = sphi 0, %s128
    $region4: #{tpu_custom_call.1} parent=1 // loop_header_branch
      %16 = sbr.rel (%p14) target = $region8
    $region5: #{tpu_custom_call.1} parent=1 // loop_body
      %s18 = ssub.s32 %s13, 1
      %s19 = ssub.s32 %s13, 2
      %s29 = sadd.s32 1, %s22
      %p30 = scmp.ge.s32.totalorder %s29, 2
      %s31 = scalar_select %p30, 0, %s29
      %s32 = sadd.s32 1, %s21
      %s33 = scalar_select %p30, %s32, %s21
      %p34 = scmp.ge.s32.totalorder %s33, 1
      %s35 = scalar_select %p34, 0, %s33
      %s36 = sadd.s32 1, %s20
      %s37 = scalar_select %p34, %s36, %s20
      %p38 = scmp.ge.s32.totalorder %s37, 2
      %s39 = scalar_select %p38, 0, %s37
      %s40 = ssub.s32 %s20, %s39
      %p41 = scmp.eq.s32.totalorder %s40, 0
      %s43 = sadd.s32 %s42, 1
      %s44 = scalar_select %p41, %s42, %s43
      %p47 = pneg %p41
      %p48 = scmp.eq.s32.totalorder %s13, 3
      %p49 = por %p47, %p48
      %p50 = scmp.ne.s32.totalorder %s42, %s45
      %p51 = scmp.eq.s32.totalorder %s13, 0
      %p52 = por %p50, %p51
      %p53 = scmp.ne.s32.totalorder %s42, %s45
      %p54 = scmp.eq.s32.totalorder %s18, 3
      %p55 = por %p53, %p54
      %p56 = scmp.ne.s32.totalorder %s45, %s46
      %p57 = scmp.eq.s32.totalorder %s18, 0
      %p58 = por %p56, %p57
      %p59 = scmp.ne.s32.totalorder %s45, %s46
      %p60 = scmp.eq.s32.totalorder %s19, 3
      %p61 = por %p59, %p60
      %p63 = scmp.ne.s32.totalorder %s46, %s62
      %p64 = scmp.eq.s32.totalorder %s19, 0
      %p65 = por %p63, %p64
      %s66 = ssub.s32 %s21, %s35
      %p67 = scmp.eq.s32.totalorder %s66, 0
      %s69 = sadd.s32 %s68, 1
      %s70 = scalar_select %p67, %s68, %s69
      %p73 = pneg %p67
      %p74 = scmp.eq.s32.totalorder %s13, 3
      %p75 = por %p73, %p74
      %p76 = scmp.ne.s32.totalorder %s68, %s71
      %p77 = scmp.eq.s32.totalorder %s13, 0
      %p78 = por %p76, %p77
      %p79 = scmp.ne.s32.totalorder %s68, %s71
      %p80 = scmp.eq.s32.totalorder %s18, 3
      %p81 = por %p79, %p80
      %p82 = scmp.ne.s32.totalorder %s71, %s72
      %p83 = scmp.eq.s32.totalorder %s18, 0
      %p84 = por %p82, %p83
      %p85 = scmp.ne.s32.totalorder %s71, %s72
      %p86 = scmp.eq.s32.totalorder %s19, 3
      %p87 = por %p85, %p86
      %p89 = scmp.ne.s32.totalorder %s72, %s88
      %p90 = scmp.eq.s32.totalorder %s19, 0
      %p91 = por %p89, %p90
      %s92 = ssub.s32 %s21, %s35
      %p93 = scmp.eq.s32.totalorder %s92, 0
      %s95 = sadd.s32 %s94, 1
      %s96 = scalar_select %p93, %s94, %s95
      %p99 = pneg %p93
      %p100 = scmp.eq.s32.totalorder %s13, 3
      %p101 = por %p99, %p100
      %p102 = scmp.ne.s32.totalorder %s94, %s97
      %p103 = scmp.eq.s32.totalorder %s13, 0
      %p104 = por %p102, %p103
      %p105 = scmp.ne.s32.totalorder %s94, %s97
      %p106 = scmp.eq.s32.totalorder %s18, 3
      %p107 = por %p105, %p106
      %p108 = scmp.ne.s32.totalorder %s97, %s98
      %p109 = scmp.eq.s32.totalorder %s18, 0
      %p110 = por %p108, %p109
      %p111 = scmp.ne.s32.totalorder %s97, %s98
      %p112 = scmp.eq.s32.totalorder %s19, 3
      %p113 = por %p111, %p112
      %p115 = scmp.ne.s32.totalorder %s98, %s114
      %p116 = scmp.eq.s32.totalorder %s19, 0
      %p117 = por %p115, %p116
      %s118 = ssub.s32 %s20, %s39
      %s119 = ssub.s32 %s22, %s31
      %s120 = sor.u32 %s118, %s119
      %s121 = ssub.s32 %s21, %s35
      %s122 = sor.u32 %s120, %s121
      %p123 = scmp.eq.s32.totalorder %s122, 0
      %s125 = sadd.s32 %s124, 1
      %s126 = scalar_select %p123, %s124, %s125
      %p129 = pneg %p123
      %p130 = scmp.eq.s32.totalorder %s13, 3
      %p131 = por %p129, %p130
      %p132 = scmp.ne.s32.totalorder %s124, %s127
      %p133 = scmp.eq.s32.totalorder %s13, 0
      %p134 = por %p132, %p133
      %p135 = scmp.ne.s32.totalorder %s124, %s127
      %p136 = scmp.eq.s32.totalorder %s18, 3
      %p137 = por %p135, %p136
      %p138 = scmp.ne.s32.totalorder %s127, %s128
      %p139 = scmp.eq.s32.totalorder %s18, 0
      %p140 = por %p138, %p139
      %p141 = scmp.ne.s32.totalorder %s127, %s128
      %p142 = scmp.eq.s32.totalorder %s19, 3
      %p143 = por %p141, %p142
      %p145 = scmp.ne.s32.totalorder %s128, %s144
      %p146 = scmp.eq.s32.totalorder %s19, 0
      %p147 = por %p145, %p146
      %p148 = scmp.le.s32.totalorder 1, %s13
      %p149 = scmp.lt.s32.totalorder %s13, 5
      %p150 = pnand %p148, %p149
      %p151 = pneg %p150
      // Predicated region
      $region9: #{tpu_custom_call.1} parent=5 // pred_check
        _
      $region10: #{tpu_custom_call.1} parent=5 // pred_check_branch
        %153 = sbr.rel (%p150) target = $region12
      $region11: #{tpu_custom_call.1} parent=5 // pred_region
        %s154 = ssub.s32 %s13, 1
        // Predicated region
        $region13: #{tpu_custom_call.1} parent=11 // pred_check
          %p155 = pneg %p84
        $region14: #{tpu_custom_call.1} parent=11 // pred_check_branch
          %157 = sbr.rel (%p155) target = $region16
        $region15: #{tpu_custom_call.1} parent=11 // pred_region
          %s159 = ssub.s32 16384, 16384
          %160 = vsyncadd [#allocation3], %s159
          %s161 = smul.addr %s24, 64
          %s162 = scalar_lea.hbm %s1, %s161
          %s163 = sshll.u32 [#allocation2], 4
          %s164 = int_to_ptr.vmem [resolvable:$true] %s163
          %169 = dma.hbm_to_vmem [thread:$0]  %s162, 16384, %s164, [#allocation3], 64, 64, 4
        $region16: #{tpu_custom_call.1} parent=11 // pred_fallthru
          _
        // Predicated region
        $region17: #{tpu_custom_call.1} parent=11 // pred_check
          %p170 = pneg %p110
        $region18: #{tpu_custom_call.1} parent=11 // pred_check_branch
          %172 = sbr.rel (%p170) target = $region20
        $region19: #{tpu_custom_call.1} parent=11 // pred_region
          %p173 = scmp.lt.s32.totalorder %s24, 0
          %s174 = scalar_select %p173, %s24, 0
          %s175 = scalar_lea.vmem %s2, %s174
        $region20: #{tpu_custom_call.1} parent=11 // pred_fallthru
          _
      $region12: #{tpu_custom_call.1} parent=5 // pred_fallthru
        _
      %p176 = scmp.lt.s32.totalorder %s13, 4
      // Predicated region
      $region21: #{tpu_custom_call.1} parent=5 // pred_check
        %p177 = pneg %p176
      $region22: #{tpu_custom_call.1} parent=5 // pred_check_branch
        %179 = sbr.rel (%p177) target = $region24
      $region23: #{tpu_custom_call.1} parent=5 // pred_region
        // Predicated region
        $region25: #{tpu_custom_call.1} parent=23 // pred_check
          %p180 = pneg %p52
        $region26: #{tpu_custom_call.1} parent=23 // pred_check_branch
          %182 = sbr.rel (%p180) target = $region28
        $region27: #{tpu_custom_call.1} parent=23 // pred_region
          %p183 = scmp.lt.s32.totalorder %s20, 1
          %s184 = scalar_select %p183, %s20, 1
          %s185 = smul.addr %s184, 54
          %s186 = smul.addr %s185, 4
          %s187 = scalar_lea.vmem %s0, %s186
        $region28: #{tpu_custom_call.1} parent=23 // pred_fallthru
          _
      $region24: #{tpu_custom_call.1} parent=5 // pred_fallthru
        _
      %p188 = scmp.le.s32.totalorder 1, %s13
      %p189 = scmp.lt.s32.totalorder %s13, 5
      %p190 = pnand %p188, %p189
      %p191 = pneg %p190
      // Predicated region
      $region29: #{tpu_custom_call.1} parent=5 // pred_check
        _
      $region30: #{tpu_custom_call.1} parent=5 // pred_check_branch
        %193 = sbr.rel (%p190) target = $region32
      $region31: #{tpu_custom_call.1} parent=5 // pred_region
        %s194 = ssub.s32 %s13, 1
        // Predicated region
        $region33: #{tpu_custom_call.1} parent=31 // pred_check
          %p195 = pneg %p84
        $region34: #{tpu_custom_call.1} parent=31 // pred_check_branch
          %197 = sbr.rel (%p195) target = $region36
        $region35: #{tpu_custom_call.1} parent=31 // pred_region
          %198 = dma.done [#allocation3], 16384
        $region36: #{tpu_custom_call.1} parent=31 // pred_fallthru
          _
        %p199 = scmp.lt.s32.totalorder %s23, 1
        %s200 = scalar_select %p199, %s23, 1
        %s201 = smul.addr %s200, 54
        %s202 = smul.addr %s201, 4
        %s203 = scalar_lea.vmem %s0, %s202
        %p204 = pneg %p58
        %p205 = pneg %p55
        %p206 = pneg %p84
        %p207 = pneg %p81
        %p208 = scmp.lt.s32.totalorder %s24, 0
        %s209 = scalar_select %p208, %s24, 0
        %s210 = scalar_lea.vmem %s2, %s209
        %p211 = pneg %p110
        %p212 = pneg %p107
        %p213 = pneg %p140
        %p214 = pneg %p137
        %s215 = sand.u32 %s127, 1
        %s216 = scalar_lea.sflag [#allocation4], %s215
        %s217 = sand.u32 %s127, 1
        %s218 = smul.addr %s217, 512
        %s219 = scalar_lea.vmem [#allocation5], %s218
        %p220 = scmp.lt.s32.totalorder %s23, 1
        %s221 = scalar_select %p220, %s23, 1
        %s222 = smul.addr %s221, 54
        %s223 = smul.addr %s222, 4
        %s224 = scalar_lea.vmem %s0, %s223
        %p225 = scmp.lt.s32.totalorder %s24, 0
        %s226 = scalar_select %p225, %s24, 0
        %s227 = scalar_lea.vmem %s2, %s226
        %s228 = smul.u32 8, %s25
        %s230 = smul.u32 %s25, 8
        %s231 = smul.u32 %s230, 3
        %s232 = smul.addr %s231, 4
        %s233 = scalar_lea.vmem %s224, %s232
        %v234 = vld [vmem:[%s233] sm:$0xf]
        %v235 = vld [vmem:[%s233 + $0x4] sm:$0xf]
        %v236 = vld [vmem:[%s233 + $0x8] sm:$0x1]
        %v237 = vld [vmem:[%s233 + $0xc] sm:$0xf]
        %v238 = vld [vmem:[%s233 + $0x10] sm:$0xf]
        %v239 = vld [vmem:[%s233 + $0x14] sm:$0x1]
        %v240 = vld [vmem:[%s233 + $0x18] sm:$0xf]
        %v241 = vld [vmem:[%s233 + $0x1c] sm:$0xf]
        %v242 = vld [vmem:[%s233 + $0x20] sm:$0x1]
        %v243 = vld [vmem:[%s233 + $0x24] sm:$0xf]
        %v244 = vld [vmem:[%s233 + $0x28] sm:$0xf]
        %v245 = vld [vmem:[%s233 + $0x2c] sm:$0x1]
        %v246 = vld [vmem:[%s233 + $0x30] sm:$0xf]
        %v247 = vld [vmem:[%s233 + $0x34] sm:$0xf]
        %v248 = vld [vmem:[%s233 + $0x38] sm:$0x1]
        %v249 = vld [vmem:[%s233 + $0x3c] sm:$0xf]
        %v250 = vld [vmem:[%s233 + $0x40] sm:$0xf]
        %v251 = vld [vmem:[%s233 + $0x44] sm:$0x1]
        %v252 = vld [vmem:[%s233 + $0x48] sm:$0xf]
        %v253 = vld [vmem:[%s233 + $0x4c] sm:$0xf]
        %v254 = vld [vmem:[%s233 + $0x50] sm:$0x1]
        %v255 = vld [vmem:[%s233 + $0x54] sm:$0xf]
        %v256 = vld [vmem:[%s233 + $0x58] sm:$0xf]
        %v257 = vld [vmem:[%s233 + $0x5c] sm:$0x1]
        %v258 = vld [vmem:[%s233 + $0x60] sm:$0xf]
        %v259 = vld [vmem:[%s233 + $0x64] sm:$0xf]
        %v260 = vld [vmem:[%s233 + $0x68] sm:$0x1]
        %v261 = vld [vmem:[%s233 + $0x6c] sm:$0xf]
        %v262 = vld [vmem:[%s233 + $0x70] sm:$0xf]
        %v263 = vld [vmem:[%s233 + $0x74] sm:$0x1]
        %v264 = vld [vmem:[%s227] sm:$0x1]
        %v281 = vunpack.c.l.b16 %v234
        %v282 = vunpack.c.l.b16 %v235
        %v283 = vunpack.c.l.b16 %v237
        %v284 = vunpack.c.l.b16 %v238
        %v285 = vunpack.c.l.b16 %v240
        %v286 = vunpack.c.l.b16 %v241
        %v287 = vunpack.c.l.b16 %v243
        %v288 = vunpack.c.l.b16 %v244
        %v289 = vunpack.c.l.b16 %v246
        %v290 = vunpack.c.l.b16 %v247
        %v291 = vunpack.c.l.b16 %v249
        %v292 = vunpack.c.l.b16 %v250
        %v293 = vunpack.c.l.b16 %v252
        %v294 = vunpack.c.l.b16 %v253
        %v295 = vunpack.c.l.b16 %v255
        %v296 = vunpack.c.l.b16 %v256
        %v297 = vpack.c.b16 %v282, %v281
        %v298 = vpack.c.b16 %v284, %v283
        %v299 = vpack.c.b16 %v286, %v285
        %v300 = vpack.c.b16 %v288, %v287
        %v301 = vpack.c.b16 %v290, %v289
        %v302 = vpack.c.b16 %v292, %v291
        %v303 = vpack.c.b16 %v294, %v293
        %v304 = vpack.c.b16 %v296, %v295
        %v321 = vunpack.c.l.b16 %v236
        %v322 = vunpack.c.l.b16 %v239
        %v323 = vunpack.c.l.b16 %v242
        %v324 = vunpack.c.l.b16 %v245
        %v325 = vunpack.c.l.b16 %v248
        %v326 = vunpack.c.l.b16 %v251
        %v327 = vunpack.c.l.b16 %v254
        %v328 = vunpack.c.l.b16 %v257
        %v329 = vpack.c.b16 %v321, %v321
        %v330 = vpack.c.b16 %v322, %v322
        %v331 = vpack.c.b16 %v323, %v323
        %v332 = vpack.c.b16 %v324, %v324
        %v333 = vpack.c.b16 %v325, %v325
        %v334 = vpack.c.b16 %v326, %v326
        %v335 = vpack.c.b16 %v327, %v327
        %v336 = vpack.c.b16 %v328, %v328
        %vm337 = vsmask.f32 7424
        %v339 = vshrl.u32 %v297, 16
        %v341 = vshll.u32 %v297, 16
        %v343 = vrot.slane %v341, 1
        %v344 = vor.u32 %v339, %v343
        %v346 = vshll.u32 %v329, 16
        %v348 = vrot.slane %v346, 1
        %v349 = vsel %vm337, %v344, %v348
        %v351 = vshrl.u32 %v298, 16
        %v353 = vshll.u32 %v298, 16
        %v355 = vrot.slane %v353, 1
        %v356 = vor.u32 %v351, %v355
        %v358 = vshll.u32 %v330, 16
        %v360 = vrot.slane %v358, 1
        %v361 = vsel %vm337, %v356, %v360
        %v363 = vshrl.u32 %v299, 16
        %v365 = vshll.u32 %v299, 16
        %v367 = vrot.slane %v365, 1
        %v368 = vor.u32 %v363, %v367
        %v370 = vshll.u32 %v331, 16
        %v372 = vrot.slane %v370, 1
        %v373 = vsel %vm337, %v368, %v372
        %v375 = vshrl.u32 %v300, 16
        %v377 = vshll.u32 %v300, 16
        %v379 = vrot.slane %v377, 1
        %v380 = vor.u32 %v375, %v379
        %v382 = vshll.u32 %v332, 16
        %v384 = vrot.slane %v382, 1
        %v385 = vsel %vm337, %v380, %v384
        %v387 = vshrl.u32 %v301, 16
        %v389 = vshll.u32 %v301, 16
        %v391 = vrot.slane %v389, 1
        %v392 = vor.u32 %v387, %v391
        %v394 = vshll.u32 %v333, 16
        %v396 = vrot.slane %v394, 1
        %v397 = vsel %vm337, %v392, %v396
        %v399 = vshrl.u32 %v302, 16
        %v401 = vshll.u32 %v302, 16
        %v403 = vrot.slane %v401, 1
        %v404 = vor.u32 %v399, %v403
        %v406 = vshll.u32 %v334, 16
        %v408 = vrot.slane %v406, 1
        %v409 = vsel %vm337, %v404, %v408
        %v411 = vshrl.u32 %v303, 16
        %v413 = vshll.u32 %v303, 16
        %v415 = vrot.slane %v413, 1
        %v416 = vor.u32 %v411, %v415
        %v418 = vshll.u32 %v335, 16
        %v420 = vrot.slane %v418, 1
        %v421 = vsel %vm337, %v416, %v420
        %v423 = vshrl.u32 %v304, 16
        %v425 = vshll.u32 %v304, 16
        %v427 = vrot.slane %v425, 1
        %v428 = vor.u32 %v423, %v427
        %v430 = vshll.u32 %v336, 16
        %v432 = vrot.slane %v430, 1
        %v433 = vsel %vm337, %v428, %v432
        %v444 = vunpack.c.l.b16 %v258
        %v445 = vunpack.c.l.b16 %v259
        %v446 = vpack.c.b16 %v445, %v444
        %v449 = vunpack.c.l.b16 %v260
        %v450 = vpack.c.b16 %v449, %v449
        %v452 = vshrl.u32 %v446, 16
        %v454 = vshll.u32 %v446, 16
        %v456 = vrot.slane %v454, 1
        %v457 = vor.u32 %v452, %v456
        %v459 = vshll.u32 %v450, 16
        %v461 = vrot.slane %v459, 1
        %v462 = vsel %vm337, %v457, %v461
        %v464 = vld [vmem:[#allocation2] sm:$0xf]
        %v465 = vld [vmem:[#allocation2 + $0x4] sm:$0xf]
        %v466 = vld [vmem:[#allocation2 + $0x8] sm:$0xf]
        %v467 = vld [vmem:[#allocation2 + $0xc] sm:$0xf]
        %v468 = vld [vmem:[#allocation2 + $0x10] sm:$0xf]
        %v469 = vld [vmem:[#allocation2 + $0x14] sm:$0xf]
        %v470 = vld [vmem:[#allocation2 + $0x18] sm:$0xf]
        %v471 = vld [vmem:[#allocation2 + $0x1c] sm:$0xf]
        %v472 = vld [vmem:[#allocation2 + $0x20] sm:$0xf]
        %v473 = vld [vmem:[#allocation2 + $0x24] sm:$0xf]
        %v474 = vld [vmem:[#allocation2 + $0x28] sm:$0xf]
        %v475 = vld [vmem:[#allocation2 + $0x2c] sm:$0xf]
        %v476 = vld [vmem:[#allocation2 + $0x30] sm:$0xf]
        %v477 = vld [vmem:[#allocation2 + $0x34] sm:$0xf]
        %v478 = vld [vmem:[#allocation2 + $0x38] sm:$0xf]
        %v479 = vld [vmem:[#allocation2 + $0x3c] sm:$0xf]
        %v480 = vld [vmem:[#allocation2 + $0x40] sm:$0xf]
        %v481 = vld [vmem:[#allocation2 + $0x44] sm:$0xf]
        %v482 = vld [vmem:[#allocation2 + $0x48] sm:$0xf]
        %v483 = vld [vmem:[#allocation2 + $0x4c] sm:$0xf]
        %v484 = vld [vmem:[#allocation2 + $0x50] sm:$0xf]
        %v485 = vld [vmem:[#allocation2 + $0x54] sm:$0xf]
        %v486 = vld [vmem:[#allocation2 + $0x58] sm:$0xf]
        %v487 = vld [vmem:[#allocation2 + $0x5c] sm:$0xf]
        %v488 = vld [vmem:[#allocation2 + $0x60] sm:$0xf]
        %v489 = vld [vmem:[#allocation2 + $0x64] sm:$0xf]
        %v490 = vld [vmem:[#allocation2 + $0x68] sm:$0xf]
        %v491 = vld [vmem:[#allocation2 + $0x6c] sm:$0xf]
        %v492 = vld [vmem:[#allocation2 + $0x70] sm:$0xf]
        %v493 = vld [vmem:[#allocation2 + $0x74] sm:$0xf]
        %v494 = vld [vmem:[#allocation2 + $0x78] sm:$0xf]
        %v495 = vld [vmem:[#allocation2 + $0x7c] sm:$0xf]
        %v496 = vld [vmem:[#allocation2 + $0x80] sm:$0xf]
        %v497 = vld [vmem:[#allocation2 + $0x84] sm:$0xf]
        %v498 = vld [vmem:[#allocation2 + $0x88] sm:$0xf]
        %v499 = vld [vmem:[#allocation2 + $0x8c] sm:$0xf]
        %v500 = vld [vmem:[#allocation2 + $0x90] sm:$0xf]
        %v501 = vld [vmem:[#allocation2 + $0x94] sm:$0xf]
        %v502 = vld [vmem:[#allocation2 + $0x98] sm:$0xf]
        %v503 = vld [vmem:[#allocation2 + $0x9c] sm:$0xf]
        %v504 = vld [vmem:[#allocation2 + $0xa0] sm:$0xf]
        %v505 = vld [vmem:[#allocation2 + $0xa4] sm:$0xf]
        %v506 = vld [vmem:[#allocation2 + $0xa8] sm:$0xf]
        %v507 = vld [vmem:[#allocation2 + $0xac] sm:$0xf]
        %v508 = vld [vmem:[#allocation2 + $0xb0] sm:$0xf]
        %v509 = vld [vmem:[#allocation2 + $0xb4] sm:$0xf]
        %v510 = vld [vmem:[#allocation2 + $0xb8] sm:$0xf]
        %v511 = vld [vmem:[#allocation2 + $0xbc] sm:$0xf]
        %v512 = vld [vmem:[#allocation2 + $0xc0] sm:$0xf]
        %v513 = vld [vmem:[#allocation2 + $0xc4] sm:$0xf]
        %v514 = vld [vmem:[#allocation2 + $0xc8] sm:$0xf]
        %v515 = vld [vmem:[#allocation2 + $0xcc] sm:$0xf]
        %v516 = vld [vmem:[#allocation2 + $0xd0] sm:$0xf]
        %v517 = vld [vmem:[#allocation2 + $0xd4] sm:$0xf]
        %v518 = vld [vmem:[#allocation2 + $0xd8] sm:$0xf]
        %v519 = vld [vmem:[#allocation2 + $0xdc] sm:$0xf]
        %v520 = vld [vmem:[#allocation2 + $0xe0] sm:$0xf]
        %v521 = vld [vmem:[#allocation2 + $0xe4] sm:$0xf]
        %v522 = vld [vmem:[#allocation2 + $0xe8] sm:$0xf]
        %v523 = vld [vmem:[#allocation2 + $0xec] sm:$0xf]
        %v524 = vld [vmem:[#allocation2 + $0xf0] sm:$0xf]
        %v525 = vld [vmem:[#allocation2 + $0xf4] sm:$0xf]
        %v526 = vld [vmem:[#allocation2 + $0xf8] sm:$0xf]
        %v527 = vld [vmem:[#allocation2 + $0xfc] sm:$0xf]
        %v529 = vlaneseq
        %v530 = vshrl.u32 %v529, 7
        %v531 = vsub.s32 0, %v530
        %v532 = vrot.slane %v264, %v531
        %v598 = vunpack.c.l.b16 %v464
        %v599 = vunpack.c.l.b16 %v465
        %v600 = vunpack.c.l.b16 %v466
        %v601 = vunpack.c.l.b16 %v467
        %v602 = vunpack.c.l.b16 %v468
        %v603 = vunpack.c.l.b16 %v469
        %v604 = vunpack.c.l.b16 %v470
        %v605 = vunpack.c.l.b16 %v471
        %v606 = vunpack.c.l.b16 %v472
        %v607 = vunpack.c.l.b16 %v473
        %v608 = vunpack.c.l.b16 %v474
        %v609 = vunpack.c.l.b16 %v475
        %v610 = vunpack.c.l.b16 %v476
        %v611 = vunpack.c.l.b16 %v477
        %v612 = vunpack.c.l.b16 %v478
        %v613 = vunpack.c.l.b16 %v479
        %v614 = vunpack.c.l.b16 %v480
        %v615 = vunpack.c.l.b16 %v481
        %v616 = vunpack.c.l.b16 %v482
        %v617 = vunpack.c.l.b16 %v483
        %v618 = vunpack.c.l.b16 %v484
        %v619 = vunpack.c.l.b16 %v485
        %v620 = vunpack.c.l.b16 %v486
        %v621 = vunpack.c.l.b16 %v487
        %v622 = vunpack.c.l.b16 %v488
        %v623 = vunpack.c.l.b16 %v489
        %v624 = vunpack.c.l.b16 %v490
        %v625 = vunpack.c.l.b16 %v491
        %v626 = vunpack.c.l.b16 %v492
        %v627 = vunpack.c.l.b16 %v493
        %v628 = vunpack.c.l.b16 %v494
        %v629 = vunpack.c.l.b16 %v495
        %v630 = vunpack.c.l.b16 %v496
        %v631 = vunpack.c.l.b16 %v497
        %v632 = vunpack.c.l.b16 %v498
        %v633 = vunpack.c.l.b16 %v499
        %v634 = vunpack.c.l.b16 %v500
        %v635 = vunpack.c.l.b16 %v501
        %v636 = vunpack.c.l.b16 %v502
        %v637 = vunpack.c.l.b16 %v503
        %v638 = vunpack.c.l.b16 %v504
        %v639 = vunpack.c.l.b16 %v505
        %v640 = vunpack.c.l.b16 %v506
        %v641 = vunpack.c.l.b16 %v507
        %v642 = vunpack.c.l.b16 %v508
        %v643 = vunpack.c.l.b16 %v509
        %v644 = vunpack.c.l.b16 %v510
        %v645 = vunpack.c.l.b16 %v511
        %v646 = vunpack.c.l.b16 %v512
        %v647 = vunpack.c.l.b16 %v513
        %v648 = vunpack.c.l.b16 %v514
        %v649 = vunpack.c.l.b16 %v515
        %v650 = vunpack.c.l.b16 %v516
        %v651 = vunpack.c.l.b16 %v517
        %v652 = vunpack.c.l.b16 %v518
        %v653 = vunpack.c.l.b16 %v519
        %v654 = vunpack.c.l.b16 %v520
        %v655 = vunpack.c.l.b16 %v521
        %v656 = vunpack.c.l.b16 %v522
        %v657 = vunpack.c.l.b16 %v523
        %v658 = vunpack.c.l.b16 %v524
        %v659 = vunpack.c.l.b16 %v525
        %v660 = vunpack.c.l.b16 %v526
        %v661 = vunpack.c.l.b16 %v527
        %v662 = vpack.c.b16 %v599, %v598
        %v663 = vpack.c.b16 %v601, %v600
        %v664 = vpack.c.b16 %v603, %v602
        %v665 = vpack.c.b16 %v605, %v604
        %v666 = vpack.c.b16 %v607, %v606
        %v667 = vpack.c.b16 %v609, %v608
        %v668 = vpack.c.b16 %v611, %v610
        %v669 = vpack.c.b16 %v613, %v612
        %v670 = vpack.c.b16 %v615, %v614
        %v671 = vpack.c.b16 %v617, %v616
        %v672 = vpack.c.b16 %v619, %v618
        %v673 = vpack.c.b16 %v621, %v620
        %v674 = vpack.c.b16 %v623, %v622
        %v675 = vpack.c.b16 %v625, %v624
        %v676 = vpack.c.b16 %v627, %v626
        %v677 = vpack.c.b16 %v629, %v628
        %v678 = vpack.c.b16 %v631, %v630
        %v679 = vpack.c.b16 %v633, %v632
        %v680 = vpack.c.b16 %v635, %v634
        %v681 = vpack.c.b16 %v637, %v636
        %v682 = vpack.c.b16 %v639, %v638
        %v683 = vpack.c.b16 %v641, %v640
        %v684 = vpack.c.b16 %v643, %v642
        %v685 = vpack.c.b16 %v645, %v644
        %v686 = vpack.c.b16 %v647, %v646
        %v687 = vpack.c.b16 %v649, %v648
        %v688 = vpack.c.b16 %v651, %v650
        %v689 = vpack.c.b16 %v653, %v652
        %v690 = vpack.c.b16 %v655, %v654
        %v691 = vpack.c.b16 %v657, %v656
        %v692 = vpack.c.b16 %v659, %v658
        %v693 = vpack.c.b16 %v661, %v660
        %726 = vmatprep.subr.bf16.mxu0 0
        %727 = vmatpush1.bf16.msra.mxu0 %v669
        %728 = vmatprep.subr.bf16.mxu0 0
        %729 = vmatpush1.bf16.msra.mxu0 %v668
        %730 = vmatprep.subr.bf16.mxu0 0
        %731 = vmatpush1.bf16.msra.mxu0 %v667
        %732 = vmatprep.subr.bf16.mxu0 0
        %733 = vmatpush1.bf16.msra.mxu0 %v666
        %734 = vmatprep.subr.bf16.mxu0 0
        %735 = vmatpush1.bf16.msra.mxu0 %v665
        %736 = vmatprep.subr.bf16.mxu0 0
        %737 = vmatpush1.bf16.msra.mxu0 %v664
        %738 = vmatprep.subr.bf16.mxu0 0
        %739 = vmatpush1.bf16.msra.mxu0 %v663
        %740 = vmatprep.subr.bf16.mxu0 0
        %741 = vmatpush1.bf16.msra.mxu0 %v662
        %742 = vmatprep.subr.bf16.mxu0 0
        %743 = vmatpush2.bf16.msra.mxu0 %v677
        %744 = vmatprep.subr.bf16.mxu0 0
        %745 = vmatpush2.bf16.msra.mxu0 %v676
        %746 = vmatprep.subr.bf16.mxu0 0
        %747 = vmatpush2.bf16.msra.mxu0 %v675
        %748 = vmatprep.subr.bf16.mxu0 0
        %749 = vmatpush2.bf16.msra.mxu0 %v674
        %750 = vmatprep.subr.bf16.mxu0 0
        %751 = vmatpush2.bf16.msra.mxu0 %v673
        %752 = vmatprep.subr.bf16.mxu0 0
        %753 = vmatpush2.bf16.msra.mxu0 %v672
        %754 = vmatprep.subr.bf16.mxu0 0
        %755 = vmatpush2.bf16.msra.mxu0 %v671
        %756 = vmatprep.subr.bf16.mxu0 0
        %757 = vmatpush2.bf16.msra.mxu0 %v670
        %758 = vmatprep.mubr.bf16.mxu0 %v349
        %759 = vmatmul.mubr.bf16.gmra.mxu0 %v297
        %v760 = vpop.f32.mrf.mxu0
        %v761 = vadd.f32 %v532, %v760
        %v762 = vpop.f32.mrf.mxu0
        %v763 = vpop.f32.mrf.mxu0
        %v764 = vadd.f32 %v532, %v763
        %v765 = vpop.f32.mrf.mxu0
        %766 = vmatprep.mubr.bf16.mxu0 %v361
        %767 = vmatmul.mubr.bf16.gmra.mxu0 %v298
        %v768 = vpop.f32.mrf.mxu0
        %v769 = vadd.f32 %v532, %v768
        %v770 = vpop.f32.mrf.mxu0
        %v771 = vpop.f32.mrf.mxu0
        %v772 = vadd.f32 %v532, %v771
        %v773 = vpop.f32.mrf.mxu0
        %774 = vmatprep.mubr.bf16.mxu0 %v373
        %775 = vmatmul.mubr.bf16.gmra.mxu0 %v299
        %v776 = vpop.f32.mrf.mxu0
        %v777 = vadd.f32 %v532, %v776
        %v778 = vpop.f32.mrf.mxu0
        %v779 = vpop.f32.mrf.mxu0
        %v780 = vadd.f32 %v532, %v779
        %v781 = vpop.f32.mrf.mxu0
        %782 = vmatprep.mubr.bf16.mxu0 %v385
        %783 = vmatmul.mubr.bf16.gmra.mxu0 %v300
        %v784 = vpop.f32.mrf.mxu0
        %v785 = vadd.f32 %v532, %v784
        %v786 = vpop.f32.mrf.mxu0
        %v787 = vpop.f32.mrf.mxu0
        %v788 = vadd.f32 %v532, %v787
        %v789 = vpop.f32.mrf.mxu0
        %790 = vmatprep.mubr.bf16.mxu0 %v397
        %791 = vmatmul.mubr.bf16.gmra.mxu0 %v301
        %v792 = vpop.f32.mrf.mxu0
        %v793 = vadd.f32 %v532, %v792
        %v794 = vpop.f32.mrf.mxu0
        %v795 = vpop.f32.mrf.mxu0
        %v796 = vadd.f32 %v532, %v795
        %v797 = vpop.f32.mrf.mxu0
        %798 = vmatprep.mubr.bf16.mxu0 %v409
        %799 = vmatmul.mubr.bf16.gmra.mxu0 %v302
        %v800 = vpop.f32.mrf.mxu0
        %v801 = vadd.f32 %v532, %v800
        %v802 = vpop.f32.mrf.mxu0
        %v803 = vpop.f32.mrf.mxu0
        %v804 = vadd.f32 %v532, %v803
        %v805 = vpop.f32.mrf.mxu0
        %806 = vmatprep.mubr.bf16.mxu0 %v421
        %807 = vmatmul.mubr.bf16.gmra.mxu0 %v303
        %v808 = vpop.f32.mrf.mxu0
        %v809 = vadd.f32 %v532, %v808
        %v810 = vpop.f32.mrf.mxu0
        %v811 = vpop.f32.mrf.mxu0
        %v812 = vadd.f32 %v532, %v811
        %v813 = vpop.f32.mrf.mxu0
        %814 = vmatprep.mubr.bf16.mxu0 %v433
        %815 = vmatmul.mubr.bf16.gmra.mxu0 %v304
        %v816 = vpop.f32.mrf.mxu0
        %v817 = vadd.f32 %v532, %v816
        %v818 = vpop.f32.mrf.mxu0
        %v819 = vpop.f32.mrf.mxu0
        %v820 = vadd.f32 %v532, %v819
        %v821 = vpop.f32.mrf.mxu0
        %822 = vdwg.mxu0
        %823 = vmatprep.subr.bf16.mxu0 0
        %824 = vmatpush1.bf16.msra.mxu0 %v685
        %825 = vmatprep.subr.bf16.mxu0 0
        %826 = vmatpush1.bf16.msra.mxu0 %v684
        %827 = vmatprep.subr.bf16.mxu0 0
        %828 = vmatpush1.bf16.msra.mxu0 %v683
        %829 = vmatprep.subr.bf16.mxu0 0
        %830 = vmatpush1.bf16.msra.mxu0 %v682
        %831 = vmatprep.subr.bf16.mxu0 0
        %832 = vmatpush1.bf16.msra.mxu0 %v681
        %833 = vmatprep.subr.bf16.mxu0 0
        %834 = vmatpush1.bf16.msra.mxu0 %v680
        %835 = vmatprep.subr.bf16.mxu0 0
        %836 = vmatpush1.bf16.msra.mxu0 %v679
        %837 = vmatprep.subr.bf16.mxu0 0
        %838 = vmatpush1.bf16.msra.mxu0 %v678
        %839 = vmatprep.subr.bf16.mxu0 0
        %840 = vmatpush2.bf16.msra.mxu0 %v693
        %841 = vmatprep.subr.bf16.mxu0 0
        %842 = vmatpush2.bf16.msra.mxu0 %v692
        %843 = vmatprep.subr.bf16.mxu0 0
        %844 = vmatpush2.bf16.msra.mxu0 %v691
        %845 = vmatprep.subr.bf16.mxu0 0
        %846 = vmatpush2.bf16.msra.mxu0 %v690
        %847 = vmatprep.subr.bf16.mxu0 0
        %848 = vmatpush2.bf16.msra.mxu0 %v689
        %849 = vmatprep.subr.bf16.mxu0 0
        %850 = vmatpush2.bf16.msra.mxu0 %v688
        %851 = vmatprep.subr.bf16.mxu0 0
        %852 = vmatpush2.bf16.msra.mxu0 %v687
        %853 = vmatprep.subr.bf16.mxu0 0
        %854 = vmatpush2.bf16.msra.mxu0 %v686
        %855 = vmatprep.mubr.bf16.mxu0 %v361
        %856 = vmatmul.mubr.bf16.gmra.mxu0 %v298
        %v857 = vpop.f32.mrf.mxu0
        %v858 = vadd.f32 %v761, %v857
        %v859 = vpop.f32.mrf.mxu0
        %v860 = vpop.f32.mrf.mxu0
        %v861 = vadd.f32 %v764, %v860
        %v862 = vpop.f32.mrf.mxu0
        %863 = vmatprep.mubr.bf16.mxu0 %v373
        %864 = vmatmul.mubr.bf16.gmra.mxu0 %v299
        %v865 = vpop.f32.mrf.mxu0
        %v866 = vadd.f32 %v769, %v865
        %v867 = vpop.f32.mrf.mxu0
        %v868 = vpop.f32.mrf.mxu0
        %v869 = vadd.f32 %v772, %v868
        %v870 = vpop.f32.mrf.mxu0
        %871 = vmatprep.mubr.bf16.mxu0 %v385
        %872 = vmatmul.mubr.bf16.gmra.mxu0 %v300
        %v873 = vpop.f32.mrf.mxu0
        %v874 = vadd.f32 %v777, %v873
        %v875 = vpop.f32.mrf.mxu0
        %v876 = vpop.f32.mrf.mxu0
        %v877 = vadd.f32 %v780, %v876
        %v878 = vpop.f32.mrf.mxu0
        %879 = vmatprep.mubr.bf16.mxu0 %v397
        %880 = vmatmul.mubr.bf16.gmra.mxu0 %v301
        %v881 = vpop.f32.mrf.mxu0
        %v882 = vadd.f32 %v785, %v881
        %v883 = vpop.f32.mrf.mxu0
        %v884 = vpop.f32.mrf.mxu0
        %v885 = vadd.f32 %v788, %v884
        %v886 = vpop.f32.mrf.mxu0
        %887 = vmatprep.mubr.bf16.mxu0 %v409
        %888 = vmatmul.mubr.bf16.gmra.mxu0 %v302
        %v889 = vpop.f32.mrf.mxu0
        %v890 = vadd.f32 %v793, %v889
        %v891 = vpop.f32.mrf.mxu0
        %v892 = vpop.f32.mrf.mxu0
        %v893 = vadd.f32 %v796, %v892
        %v894 = vpop.f32.mrf.mxu0
        %895 = vmatprep.mubr.bf16.mxu0 %v421
        %896 = vmatmul.mubr.bf16.gmra.mxu0 %v303
        %v897 = vpop.f32.mrf.mxu0
        %v898 = vadd.f32 %v801, %v897
        %v899 = vpop.f32.mrf.mxu0
        %v900 = vpop.f32.mrf.mxu0
        %v901 = vadd.f32 %v804, %v900
        %v902 = vpop.f32.mrf.mxu0
        %903 = vmatprep.mubr.bf16.mxu0 %v433
        %904 = vmatmul.mubr.bf16.gmra.mxu0 %v304
        %v905 = vpop.f32.mrf.mxu0
        %v906 = vadd.f32 %v809, %v905
        %v907 = vpop.f32.mrf.mxu0
        %v908 = vpop.f32.mrf.mxu0
        %v909 = vadd.f32 %v812, %v908
        %v910 = vpop.f32.mrf.mxu0
        %911 = vmatprep.mubr.bf16.mxu0 %v462
        %912 = vmatmul.mubr.bf16.gmra.mxu0 %v446
        %v913 = vpop.f32.mrf.mxu0
        %v914 = vadd.f32 %v817, %v913
        %v915 = vpop.f32.mrf.mxu0
        %v916 = vpop.f32.mrf.mxu0
        %v917 = vadd.f32 %v820, %v916
        %v918 = vpop.f32.mrf.mxu0
        %919 = vdwg.mxu0
        %920 = vst [vmem:[%s219] sm:$0xff] %v858
        %921 = vst [vmem:[%s219 + $0x8] sm:$0xff] %v861
        %922 = vst [vmem:[%s219 + $0x10] sm:$0xff] %v866
        %923 = vst [vmem:[%s219 + $0x18] sm:$0xff] %v869
        %924 = vst [vmem:[%s219 + $0x20] sm:$0xff] %v874
        %925 = vst [vmem:[%s219 + $0x28] sm:$0xff] %v877
        %926 = vst [vmem:[%s219 + $0x30] sm:$0xff] %v882
        %927 = vst [vmem:[%s219 + $0x38] sm:$0xff] %v885
        %928 = vst [vmem:[%s219 + $0x40] sm:$0xff] %v890
        %929 = vst [vmem:[%s219 + $0x48] sm:$0xff] %v893
        %930 = vst [vmem:[%s219 + $0x50] sm:$0xff] %v898
        %931 = vst [vmem:[%s219 + $0x58] sm:$0xff] %v901
        %932 = vst [vmem:[%s219 + $0x60] sm:$0xff] %v906
        %933 = vst [vmem:[%s219 + $0x68] sm:$0xff] %v909
        %934 = vst [vmem:[%s219 + $0x70] sm:$0xff] %v914
        %935 = vst [vmem:[%s219 + $0x78] sm:$0xff] %v917
        %v936 = vshrl.u32 %v329, 16
        %v938 = vshrl.u32 %v330, 16
        %v940 = vshrl.u32 %v331, 16
        %v942 = vshrl.u32 %v332, 16
        %v944 = vshrl.u32 %v333, 16
        %v946 = vshrl.u32 %v334, 16
        %v948 = vshrl.u32 %v335, 16
        %v950 = vshrl.u32 %v336, 16
        %v952 = vshrl.u32 %v450, 16
        %v955 = vshrl.u32 %v349, 16
        %v957 = vshll.u32 %v349, 16
        %v959 = vrot.slane %v957, 1
        %v960 = vor.u32 %v955, %v959
        %v962 = vshll.u32 %v936, 16
        %v964 = vrot.slane %v962, 1
        %v965 = vsel %vm337, %v960, %v964
        %v967 = vshrl.u32 %v361, 16
        %v969 = vshll.u32 %v361, 16
        %v971 = vrot.slane %v969, 1
        %v972 = vor.u32 %v967, %v971
        %v974 = vshll.u32 %v938, 16
        %v976 = vrot.slane %v974, 1
        %v977 = vsel %vm337, %v972, %v976
        %v979 = vshrl.u32 %v373, 16
        %v981 = vshll.u32 %v373, 16
        %v983 = vrot.slane %v981, 1
        %v984 = vor.u32 %v979, %v983
        %v986 = vshll.u32 %v940, 16
        %v988 = vrot.slane %v986, 1
        %v989 = vsel %vm337, %v984, %v988
        %v991 = vshrl.u32 %v385, 16
        %v993 = vshll.u32 %v385, 16
        %v995 = vrot.slane %v993, 1
        %v996 = vor.u32 %v991, %v995
        %v998 = vshll.u32 %v942, 16
        %v1000 = vrot.slane %v998, 1
        %v1001 = vsel %vm337, %v996, %v1000
        %v1003 = vshrl.u32 %v397, 16
        %v1005 = vshll.u32 %v397, 16
        %v1007 = vrot.slane %v1005, 1
        %v1008 = vor.u32 %v1003, %v1007
        %v1010 = vshll.u32 %v944, 16
        %v1012 = vrot.slane %v1010, 1
        %v1013 = vsel %vm337, %v1008, %v1012
        %v1015 = vshrl.u32 %v409, 16
        %v1017 = vshll.u32 %v409, 16
        %v1019 = vrot.slane %v1017, 1
        %v1020 = vor.u32 %v1015, %v1019
        %v1022 = vshll.u32 %v946, 16
        %v1024 = vrot.slane %v1022, 1
        %v1025 = vsel %vm337, %v1020, %v1024
        %v1027 = vshrl.u32 %v421, 16
        %v1029 = vshll.u32 %v421, 16
        %v1031 = vrot.slane %v1029, 1
        %v1032 = vor.u32 %v1027, %v1031
        %v1034 = vshll.u32 %v948, 16
        %v1036 = vrot.slane %v1034, 1
        %v1037 = vsel %vm337, %v1032, %v1036
        %v1039 = vshrl.u32 %v433, 16
        %v1041 = vshll.u32 %v433, 16
        %v1043 = vrot.slane %v1041, 1
        %v1044 = vor.u32 %v1039, %v1043
        %v1046 = vshll.u32 %v950, 16
        %v1048 = vrot.slane %v1046, 1
        %v1049 = vsel %vm337, %v1044, %v1048
        %v1051 = vshrl.u32 %v462, 16
        %v1053 = vshll.u32 %v462, 16
        %v1055 = vrot.slane %v1053, 1
        %v1056 = vor.u32 %v1051, %v1055
        %v1058 = vshll.u32 %v952, 16
        %v1060 = vrot.slane %v1058, 1
        %v1061 = vsel %vm337, %v1056, %v1060
        %s1071 = scalar_lea.vmem [#allocation2], 256
        %v1072 = vld [vmem:[%s1071] sm:$0xf]
        %v1073 = vld [vmem:[%s1071 + $0x4] sm:$0xf]
        %v1074 = vld [vmem:[%s1071 + $0x8] sm:$0xf]
        %v1075 = vld [vmem:[%s1071 + $0xc] sm:$0xf]
        %v1076 = vld [vmem:[%s1071 + $0x10] sm:$0xf]
        %v1077 = vld [vmem:[%s1071 + $0x14] sm:$0xf]
        %v1078 = vld [vmem:[%s1071 + $0x18] sm:$0xf]
        %v1079 = vld [vmem:[%s1071 + $0x1c] sm:$0xf]
        %v1080 = vld [vmem:[%s1071 + $0x20] sm:$0xf]
        %v1081 = vld [vmem:[%s1071 + $0x24] sm:$0xf]
        %v1082 = vld [vmem:[%s1071 + $0x28] sm:$0xf]
        %v1083 = vld [vmem:[%s1071 + $0x2c] sm:$0xf]
        %v1084 = vld [vmem:[%s1071 + $0x30] sm:$0xf]
        %v1085 = vld [vmem:[%s1071 + $0x34] sm:$0xf]
        %v1086 = vld [vmem:[%s1071 + $0x38] sm:$0xf]
        %v1087 = vld [vmem:[%s1071 + $0x3c] sm:$0xf]
        %v1088 = vld [vmem:[%s1071 + $0x40] sm:$0xf]
        %v1089 = vld [vmem:[%s1071 + $0x44] sm:$0xf]
        %v1090 = vld [vmem:[%s1071 + $0x48] sm:$0xf]
        %v1091 = vld [vmem:[%s1071 + $0x4c] sm:$0xf]
        %v1092 = vld [vmem:[%s1071 + $0x50] sm:$0xf]
        %v1093 = vld [vmem:[%s1071 + $0x54] sm:$0xf]
        %v1094 = vld [vmem:[%s1071 + $0x58] sm:$0xf]
        %v1095 = vld [vmem:[%s1071 + $0x5c] sm:$0xf]
        %v1096 = vld [vmem:[%s1071 + $0x60] sm:$0xf]
        %v1097 = vld [vmem:[%s1071 + $0x64] sm:$0xf]
        %v1098 = vld [vmem:[%s1071 + $0x68] sm:$0xf]
        %v1099 = vld [vmem:[%s1071 + $0x6c] sm:$0xf]
        %v1100 = vld [vmem:[%s1071 + $0x70] sm:$0xf]
        %v1101 = vld [vmem:[%s1071 + $0x74] sm:$0xf]
        %v1102 = vld [vmem:[%s1071 + $0x78] sm:$0xf]
        %v1103 = vld [vmem:[%s1071 + $0x7c] sm:$0xf]
        %v1104 = vld [vmem:[%s1071 + $0x80] sm:$0xf]
        %v1105 = vld [vmem:[%s1071 + $0x84] sm:$0xf]
        %v1106 = vld [vmem:[%s1071 + $0x88] sm:$0xf]
        %v1107 = vld [vmem:[%s1071 + $0x8c] sm:$0xf]
        %v1108 = vld [vmem:[%s1071 + $0x90] sm:$0xf]
        %v1109 = vld [vmem:[%s1071 + $0x94] sm:$0xf]
        %v1110 = vld [vmem:[%s1071 + $0x98] sm:$0xf]
        %v1111 = vld [vmem:[%s1071 + $0x9c] sm:$0xf]
        %v1112 = vld [vmem:[%s1071 + $0xa0] sm:$0xf]
        %v1113 = vld [vmem:[%s1071 + $0xa4] sm:$0xf]
        %v1114 = vld [vmem:[%s1071 + $0xa8] sm:$0xf]
        %v1115 = vld [vmem:[%s1071 + $0xac] sm:$0xf]
        %v1116 = vld [vmem:[%s1071 + $0xb0] sm:$0xf]
        %v1117 = vld [vmem:[%s1071 + $0xb4] sm:$0xf]
        %v1118 = vld [vmem:[%s1071 + $0xb8] sm:$0xf]
        %v1119 = vld [vmem:[%s1071 + $0xbc] sm:$0xf]
        %v1120 = vld [vmem:[%s1071 + $0xc0] sm:$0xf]
        %v1121 = vld [vmem:[%s1071 + $0xc4] sm:$0xf]
        %v1122 = vld [vmem:[%s1071 + $0xc8] sm:$0xf]
        %v1123 = vld [vmem:[%s1071 + $0xcc] sm:$0xf]
        %v1124 = vld [vmem:[%s1071 + $0xd0] sm:$0xf]
        %v1125 = vld [vmem:[%s1071 + $0xd4] sm:$0xf]
        %v1126 = vld [vmem:[%s1071 + $0xd8] sm:$0xf]
        %v1127 = vld [vmem:[%s1071 + $0xdc] sm:$0xf]
        %v1128 = vld [vmem:[%s1071 + $0xe0] sm:$0xf]
        %v1129 = vld [vmem:[%s1071 + $0xe4] sm:$0xf]
        %v1130 = vld [vmem:[%s1071 + $0xe8] sm:$0xf]
        %v1131 = vld [vmem:[%s1071 + $0xec] sm:$0xf]
        %v1132 = vld [vmem:[%s1071 + $0xf0] sm:$0xf]
        %v1133 = vld [vmem:[%s1071 + $0xf4] sm:$0xf]
        %v1134 = vld [vmem:[%s1071 + $0xf8] sm:$0xf]
        %v1135 = vld [vmem:[%s1071 + $0xfc] sm:$0xf]
        %v1200 = vunpack.c.l.b16 %v1072
        %v1201 = vunpack.c.l.b16 %v1073
        %v1202 = vunpack.c.l.b16 %v1074
        %v1203 = vunpack.c.l.b16 %v1075
        %v1204 = vunpack.c.l.b16 %v1076
        %v1205 = vunpack.c.l.b16 %v1077
        %v1206 = vunpack.c.l.b16 %v1078
        %v1207 = vunpack.c.l.b16 %v1079
        %v1208 = vunpack.c.l.b16 %v1080
        %v1209 = vunpack.c.l.b16 %v1081
        %v1210 = vunpack.c.l.b16 %v1082
        %v1211 = vunpack.c.l.b16 %v1083
        %v1212 = vunpack.c.l.b16 %v1084
        %v1213 = vunpack.c.l.b16 %v1085
        %v1214 = vunpack.c.l.b16 %v1086
        %v1215 = vunpack.c.l.b16 %v1087
        %v1216 = vunpack.c.l.b16 %v1088
        %v1217 = vunpack.c.l.b16 %v1089
        %v1218 = vunpack.c.l.b16 %v1090
        %v1219 = vunpack.c.l.b16 %v1091
        %v1220 = vunpack.c.l.b16 %v1092
        %v1221 = vunpack.c.l.b16 %v1093
        %v1222 = vunpack.c.l.b16 %v1094
        %v1223 = vunpack.c.l.b16 %v1095
        %v1224 = vunpack.c.l.b16 %v1096
        %v1225 = vunpack.c.l.b16 %v1097
        %v1226 = vunpack.c.l.b16 %v1098
        %v1227 = vunpack.c.l.b16 %v1099
        %v1228 = vunpack.c.l.b16 %v1100
        %v1229 = vunpack.c.l.b16 %v1101
        %v1230 = vunpack.c.l.b16 %v1102
        %v1231 = vunpack.c.l.b16 %v1103
        %v1232 = vunpack.c.l.b16 %v1104
        %v1233 = vunpack.c.l.b16 %v1105
        %v1234 = vunpack.c.l.b16 %v1106
        %v1235 = vunpack.c.l.b16 %v1107
        %v1236 = vunpack.c.l.b16 %v1108
        %v1237 = vunpack.c.l.b16 %v1109
        %v1238 = vunpack.c.l.b16 %v1110
        %v1239 = vunpack.c.l.b16 %v1111
        %v1240 = vunpack.c.l.b16 %v1112
        %v1241 = vunpack.c.l.b16 %v1113
        %v1242 = vunpack.c.l.b16 %v1114
        %v1243 = vunpack.c.l.b16 %v1115
        %v1244 = vunpack.c.l.b16 %v1116
        %v1245 = vunpack.c.l.b16 %v1117
        %v1246 = vunpack.c.l.b16 %v1118
        %v1247 = vunpack.c.l.b16 %v1119
        %v1248 = vunpack.c.l.b16 %v1120
        %v1249 = vunpack.c.l.b16 %v1121
        %v1250 = vunpack.c.l.b16 %v1122
        %v1251 = vunpack.c.l.b16 %v1123
        %v1252 = vunpack.c.l.b16 %v1124
        %v1253 = vunpack.c.l.b16 %v1125
        %v1254 = vunpack.c.l.b16 %v1126
        %v1255 = vunpack.c.l.b16 %v1127
        %v1256 = vunpack.c.l.b16 %v1128
        %v1257 = vunpack.c.l.b16 %v1129
        %v1258 = vunpack.c.l.b16 %v1130
        %v1259 = vunpack.c.l.b16 %v1131
        %v1260 = vunpack.c.l.b16 %v1132
        %v1261 = vunpack.c.l.b16 %v1133
        %v1262 = vunpack.c.l.b16 %v1134
        %v1263 = vunpack.c.l.b16 %v1135
        %v1264 = vpack.c.b16 %v1201, %v1200
        %v1265 = vpack.c.b16 %v1203, %v1202
        %v1266 = vpack.c.b16 %v1205, %v1204
        %v1267 = vpack.c.b16 %v1207, %v1206
        %v1268 = vpack.c.b16 %v1209, %v1208
        %v1269 = vpack.c.b16 %v1211, %v1210
        %v1270 = vpack.c.b16 %v1213, %v1212
        %v1271 = vpack.c.b16 %v1215, %v1214
        %v1272 = vpack.c.b16 %v1217, %v1216
        %v1273 = vpack.c.b16 %v1219, %v1218
        %v1274 = vpack.c.b16 %v1221, %v1220
        %v1275 = vpack.c.b16 %v1223, %v1222
        %v1276 = vpack.c.b16 %v1225, %v1224
        %v1277 = vpack.c.b16 %v1227, %v1226
        %v1278 = vpack.c.b16 %v1229, %v1228
        %v1279 = vpack.c.b16 %v1231, %v1230
        %v1280 = vpack.c.b16 %v1233, %v1232
        %v1281 = vpack.c.b16 %v1235, %v1234
        %v1282 = vpack.c.b16 %v1237, %v1236
        %v1283 = vpack.c.b16 %v1239, %v1238
        %v1284 = vpack.c.b16 %v1241, %v1240
        %v1285 = vpack.c.b16 %v1243, %v1242
        %v1286 = vpack.c.b16 %v1245, %v1244
        %v1287 = vpack.c.b16 %v1247, %v1246
        %v1288 = vpack.c.b16 %v1249, %v1248
        %v1289 = vpack.c.b16 %v1251, %v1250
        %v1290 = vpack.c.b16 %v1253, %v1252
        %v1291 = vpack.c.b16 %v1255, %v1254
        %v1292 = vpack.c.b16 %v1257, %v1256
        %v1293 = vpack.c.b16 %v1259, %v1258
        %v1294 = vpack.c.b16 %v1261, %v1260
        %v1295 = vpack.c.b16 %v1263, %v1262
        %1328 = vmatprep.subr.bf16.mxu0 0
        %1329 = vmatpush1.bf16.msra.mxu0 %v1271
        %1330 = vmatprep.subr.bf16.mxu0 0
        %1331 = vmatpush1.bf16.msra.mxu0 %v1270
        %1332 = vmatprep.subr.bf16.mxu0 0
        %1333 = vmatpush1.bf16.msra.mxu0 %v1269
        %1334 = vmatprep.subr.bf16.mxu0 0
        %1335 = vmatpush1.bf16.msra.mxu0 %v1268
        %1336 = vmatprep.subr.bf16.mxu0 0
        %1337 = vmatpush1.bf16.msra.mxu0 %v1267
        %1338 = vmatprep.subr.bf16.mxu0 0
        %1339 = vmatpush1.bf16.msra.mxu0 %v1266
        %1340 = vmatprep.subr.bf16.mxu0 0
        %1341 = vmatpush1.bf16.msra.mxu0 %v1265
        %1342 = vmatprep.subr.bf16.mxu0 0
        %1343 = vmatpush1.bf16.msra.mxu0 %v1264
        %1344 = vmatprep.subr.bf16.mxu0 0
        %1345 = vmatpush2.bf16.msra.mxu0 %v1279
        %1346 = vmatprep.subr.bf16.mxu0 0
        %1347 = vmatpush2.bf16.msra.mxu0 %v1278
        %1348 = vmatprep.subr.bf16.mxu0 0
        %1349 = vmatpush2.bf16.msra.mxu0 %v1277
        %1350 = vmatprep.subr.bf16.mxu0 0
        %1351 = vmatpush2.bf16.msra.mxu0 %v1276
        %1352 = vmatprep.subr.bf16.mxu0 0
        %1353 = vmatpush2.bf16.msra.mxu0 %v1275
        %1354 = vmatprep.subr.bf16.mxu0 0
        %1355 = vmatpush2.bf16.msra.mxu0 %v1274
        %1356 = vmatprep.subr.bf16.mxu0 0
        %1357 = vmatpush2.bf16.msra.mxu0 %v1273
        %1358 = vmatprep.subr.bf16.mxu0 0
        %1359 = vmatpush2.bf16.msra.mxu0 %v1272
        %1360 = vmatprep.mubr.bf16.mxu0 %v965
        %1361 = vmatmul.mubr.bf16.gmra.mxu0 %v349
        %v1362 = vpop.f32.mrf.mxu0
        %v1363 = vadd.f32 %v532, %v1362
        %v1364 = vpop.f32.mrf.mxu0
        %v1365 = vpop.f32.mrf.mxu0
        %v1366 = vadd.f32 %v532, %v1365
        %v1367 = vpop.f32.mrf.mxu0
        %1368 = vmatprep.mubr.bf16.mxu0 %v977
        %1369 = vmatmul.mubr.bf16.gmra.mxu0 %v361
        %v1370 = vpop.f32.mrf.mxu0
        %v1371 = vadd.f32 %v532, %v1370
        %v1372 = vpop.f32.mrf.mxu0
        %v1373 = vpop.f32.mrf.mxu0
        %v1374 = vadd.f32 %v532, %v1373
        %v1375 = vpop.f32.mrf.mxu0
        %1376 = vmatprep.mubr.bf16.mxu0 %v989
        %1377 = vmatmul.mubr.bf16.gmra.mxu0 %v373
        %v1378 = vpop.f32.mrf.mxu0
        %v1379 = vadd.f32 %v532, %v1378
        %v1380 = vpop.f32.mrf.mxu0
        %v1381 = vpop.f32.mrf.mxu0
        %v1382 = vadd.f32 %v532, %v1381
        %v1383 = vpop.f32.mrf.mxu0
        %1384 = vmatprep.mubr.bf16.mxu0 %v1001
        %1385 = vmatmul.mubr.bf16.gmra.mxu0 %v385
        %v1386 = vpop.f32.mrf.mxu0
        %v1387 = vadd.f32 %v532, %v1386
        %v1388 = vpop.f32.mrf.mxu0
        %v1389 = vpop.f32.mrf.mxu0
        %v1390 = vadd.f32 %v532, %v1389
        %v1391 = vpop.f32.mrf.mxu0
        %1392 = vmatprep.mubr.bf16.mxu0 %v1013
        %1393 = vmatmul.mubr.bf16.gmra.mxu0 %v397
        %v1394 = vpop.f32.mrf.mxu0
        %v1395 = vadd.f32 %v532, %v1394
        %v1396 = vpop.f32.mrf.mxu0
        %v1397 = vpop.f32.mrf.mxu0
        %v1398 = vadd.f32 %v532, %v1397
        %v1399 = vpop.f32.mrf.mxu0
        %1400 = vmatprep.mubr.bf16.mxu0 %v1025
        %1401 = vmatmul.mubr.bf16.gmra.mxu0 %v409
        %v1402 = vpop.f32.mrf.mxu0
        %v1403 = vadd.f32 %v532, %v1402
        %v1404 = vpop.f32.mrf.mxu0
        %v1405 = vpop.f32.mrf.mxu0
        %v1406 = vadd.f32 %v532, %v1405
        %v1407 = vpop.f32.mrf.mxu0
        %1408 = vmatprep.mubr.bf16.mxu0 %v1037
        %1409 = vmatmul.mubr.bf16.gmra.mxu0 %v421
        %v1410 = vpop.f32.mrf.mxu0
        %v1411 = vadd.f32 %v532, %v1410
        %v1412 = vpop.f32.mrf.mxu0
        %v1413 = vpop.f32.mrf.mxu0
        %v1414 = vadd.f32 %v532, %v1413
        %v1415 = vpop.f32.mrf.mxu0
        %1416 = vmatprep.mubr.bf16.mxu0 %v1049
        %1417 = vmatmul.mubr.bf16.gmra.mxu0 %v433
        %v1418 = vpop.f32.mrf.mxu0
        %v1419 = vadd.f32 %v532, %v1418
        %v1420 = vpop.f32.mrf.mxu0
        %v1421 = vpop.f32.mrf.mxu0
        %v1422 = vadd.f32 %v532, %v1421
        %v1423 = vpop.f32.mrf.mxu0
        %1424 = vdwg.mxu0
        %1425 = vmatprep.subr.bf16.mxu0 0
        %1426 = vmatpush1.bf16.msra.mxu0 %v1287
        %1427 = vmatprep.subr.bf16.mxu0 0
        %1428 = vmatpush1.bf16.msra.mxu0 %v1286
        %1429 = vmatprep.subr.bf16.mxu0 0
        %1430 = vmatpush1.bf16.msra.mxu0 %v1285
        %1431 = vmatprep.subr.bf16.mxu0 0
        %1432 = vmatpush1.bf16.msra.mxu0 %v1284
        %1433 = vmatprep.subr.bf16.mxu0 0
        %1434 = vmatpush1.bf16.msra.mxu0 %v1283
        %1435 = vmatprep.subr.bf16.mxu0 0
        %1436 = vmatpush1.bf16.msra.mxu0 %v1282
        %1437 = vmatprep.subr.bf16.mxu0 0
        %1438 = vmatpush1.bf16.msra.mxu0 %v1281
        %1439 = vmatprep.subr.bf16.mxu0 0
        %1440 = vmatpush1.bf16.msra.mxu0 %v1280
        %1441 = vmatprep.subr.bf16.mxu0 0
        %1442 = vmatpush2.bf16.msra.mxu0 %v1295
        %1443 = vmatprep.subr.bf16.mxu0 0
        %1444 = vmatpush2.bf16.msra.mxu0 %v1294
        %1445 = vmatprep.subr.bf16.mxu0 0
        %1446 = vmatpush2.bf16.msra.mxu0 %v1293
        %1447 = vmatprep.subr.bf16.mxu0 0
        %1448 = vmatpush2.bf16.msra.mxu0 %v1292
        %1449 = vmatprep.subr.bf16.mxu0 0
        %1450 = vmatpush2.bf16.msra.mxu0 %v1291
        %1451 = vmatprep.subr.bf16.mxu0 0
        %1452 = vmatpush2.bf16.msra.mxu0 %v1290
        %1453 = vmatprep.subr.bf16.mxu0 0
        %1454 = vmatpush2.bf16.msra.mxu0 %v1289
        %1455 = vmatprep.subr.bf16.mxu0 0
        %1456 = vmatpush2.bf16.msra.mxu0 %v1288
        %1457 = vmatprep.mubr.bf16.mxu0 %v977
        %1458 = vmatmul.mubr.bf16.gmra.mxu0 %v361
        %v1459 = vpop.f32.mrf.mxu0
        %v1460 = vadd.f32 %v1363, %v1459
        %v1461 = vpop.f32.mrf.mxu0
        %v1462 = vpop.f32.mrf.mxu0
        %v1463 = vadd.f32 %v1366, %v1462
        %v1464 = vpop.f32.mrf.mxu0
        %1465 = vmatprep.mubr.bf16.mxu0 %v989
        %1466 = vmatmul.mubr.bf16.gmra.mxu0 %v373
        %v1467 = vpop.f32.mrf.mxu0
        %v1468 = vadd.f32 %v1371, %v1467
        %v1469 = vpop.f32.mrf.mxu0
        %v1470 = vpop.f32.mrf.mxu0
        %v1471 = vadd.f32 %v1374, %v1470
        %v1472 = vpop.f32.mrf.mxu0
        %1473 = vmatprep.mubr.bf16.mxu0 %v1001
        %1474 = vmatmul.mubr.bf16.gmra.mxu0 %v385
        %v1475 = vpop.f32.mrf.mxu0
        %v1476 = vadd.f32 %v1379, %v1475
        %v1477 = vpop.f32.mrf.mxu0
        %v1478 = vpop.f32.mrf.mxu0
        %v1479 = vadd.f32 %v1382, %v1478
        %v1480 = vpop.f32.mrf.mxu0
        %1481 = vmatprep.mubr.bf16.mxu0 %v1013
        %1482 = vmatmul.mubr.bf16.gmra.mxu0 %v397
        %v1483 = vpop.f32.mrf.mxu0
        %v1484 = vadd.f32 %v1387, %v1483
        %v1485 = vpop.f32.mrf.mxu0
        %v1486 = vpop.f32.mrf.mxu0
        %v1487 = vadd.f32 %v1390, %v1486
        %v1488 = vpop.f32.mrf.mxu0
        %1489 = vmatprep.mubr.bf16.mxu0 %v1025
        %1490 = vmatmul.mubr.bf16.gmra.mxu0 %v409
        %v1491 = vpop.f32.mrf.mxu0
        %v1492 = vadd.f32 %v1395, %v1491
        %v1493 = vpop.f32.mrf.mxu0
        %v1494 = vpop.f32.mrf.mxu0
        %v1495 = vadd.f32 %v1398, %v1494
        %v1496 = vpop.f32.mrf.mxu0
        %1497 = vmatprep.mubr.bf16.mxu0 %v1037
        %1498 = vmatmul.mubr.bf16.gmra.mxu0 %v421
        %v1499 = vpop.f32.mrf.mxu0
        %v1500 = vadd.f32 %v1403, %v1499
        %v1501 = vpop.f32.mrf.mxu0
        %v1502 = vpop.f32.mrf.mxu0
        %v1503 = vadd.f32 %v1406, %v1502
        %v1504 = vpop.f32.mrf.mxu0
        %1505 = vmatprep.mubr.bf16.mxu0 %v1049
        %1506 = vmatmul.mubr.bf16.gmra.mxu0 %v433
        %v1507 = vpop.f32.mrf.mxu0
        %v1508 = vadd.f32 %v1411, %v1507
        %v1509 = vpop.f32.mrf.mxu0
        %v1510 = vpop.f32.mrf.mxu0
        %v1511 = vadd.f32 %v1414, %v1510
        %v1512 = vpop.f32.mrf.mxu0
        %1513 = vmatprep.mubr.bf16.mxu0 %v1061
        %1514 = vmatmul.mubr.bf16.gmra.mxu0 %v462
        %v1515 = vpop.f32.mrf.mxu0
        %v1516 = vadd.f32 %v1419, %v1515
        %v1517 = vpop.f32.mrf.mxu0
        %v1518 = vpop.f32.mrf.mxu0
        %v1519 = vadd.f32 %v1422, %v1518
        %v1520 = vpop.f32.mrf.mxu0
        %1521 = vdwg.mxu0
        %s1522 = scalar_lea.vmem %s219, 128 [#allocation5]
        %1523 = vst [vmem:[%s1522] sm:$0xff] %v1460
        %1524 = vst [vmem:[%s1522 + $0x8] sm:$0xff] %v1463
        %1525 = vst [vmem:[%s1522 + $0x10] sm:$0xff] %v1468
        %1526 = vst [vmem:[%s1522 + $0x18] sm:$0xff] %v1471
        %1527 = vst [vmem:[%s1522 + $0x20] sm:$0xff] %v1476
        %1528 = vst [vmem:[%s1522 + $0x28] sm:$0xff] %v1479
        %1529 = vst [vmem:[%s1522 + $0x30] sm:$0xff] %v1484
        %1530 = vst [vmem:[%s1522 + $0x38] sm:$0xff] %v1487
        %1531 = vst [vmem:[%s1522 + $0x40] sm:$0xff] %v1492
        %1532 = vst [vmem:[%s1522 + $0x48] sm:$0xff] %v1495
        %1533 = vst [vmem:[%s1522 + $0x50] sm:$0xff] %v1500
        %1534 = vst [vmem:[%s1522 + $0x58] sm:$0xff] %v1503
        %1535 = vst [vmem:[%s1522 + $0x60] sm:$0xff] %v1508
        %1536 = vst [vmem:[%s1522 + $0x68] sm:$0xff] %v1511
        %1537 = vst [vmem:[%s1522 + $0x70] sm:$0xff] %v1516
        %1538 = vst [vmem:[%s1522 + $0x78] sm:$0xff] %v1519
        %v1541 = vunpack.c.l.b16 %v261
        %v1542 = vunpack.c.l.b16 %v262
        %v1543 = vpack.c.b16 %v1542, %v1541
        %v1546 = vunpack.c.l.b16 %v263
        %v1547 = vpack.c.b16 %v1546, %v1546
        %v1549 = vshrl.u32 %v1543, 16
        %v1551 = vshll.u32 %v1543, 16
        %v1553 = vrot.slane %v1551, 1
        %v1554 = vor.u32 %v1549, %v1553
        %v1556 = vshll.u32 %v1547, 16
        %v1558 = vrot.slane %v1556, 1
        %v1559 = vsel %vm337, %v1554, %v1558
        %s1561 = scalar_lea.vmem [#allocation2], 512
        %v1562 = vld [vmem:[%s1561] sm:$0xf]
        %v1563 = vld [vmem:[%s1561 + $0x4] sm:$0xf]
        %v1564 = vld [vmem:[%s1561 + $0x8] sm:$0xf]
        %v1565 = vld [vmem:[%s1561 + $0xc] sm:$0xf]
        %v1566 = vld [vmem:[%s1561 + $0x10] sm:$0xf]
        %v1567 = vld [vmem:[%s1561 + $0x14] sm:$0xf]
        %v1568 = vld [vmem:[%s1561 + $0x18] sm:$0xf]
        %v1569 = vld [vmem:[%s1561 + $0x1c] sm:$0xf]
        %v1570 = vld [vmem:[%s1561 + $0x20] sm:$0xf]
        %v1571 = vld [vmem:[%s1561 + $0x24] sm:$0xf]
        %v1572 = vld [vmem:[%s1561 + $0x28] sm:$0xf]
        %v1573 = vld [vmem:[%s1561 + $0x2c] sm:$0xf]
        %v1574 = vld [vmem:[%s1561 + $0x30] sm:$0xf]
        %v1575 = vld [vmem:[%s1561 + $0x34] sm:$0xf]
        %v1576 = vld [vmem:[%s1561 + $0x38] sm:$0xf]
        %v1577 = vld [vmem:[%s1561 + $0x3c] sm:$0xf]
        %v1578 = vld [vmem:[%s1561 + $0x40] sm:$0xf]
        %v1579 = vld [vmem:[%s1561 + $0x44] sm:$0xf]
        %v1580 = vld [vmem:[%s1561 + $0x48] sm:$0xf]
        %v1581 = vld [vmem:[%s1561 + $0x4c] sm:$0xf]
        %v1582 = vld [vmem:[%s1561 + $0x50] sm:$0xf]
        %v1583 = vld [vmem:[%s1561 + $0x54] sm:$0xf]
        %v1584 = vld [vmem:[%s1561 + $0x58] sm:$0xf]
        %v1585 = vld [vmem:[%s1561 + $0x5c] sm:$0xf]
        %v1586 = vld [vmem:[%s1561 + $0x60] sm:$0xf]
        %v1587 = vld [vmem:[%s1561 + $0x64] sm:$0xf]
        %v1588 = vld [vmem:[%s1561 + $0x68] sm:$0xf]
        %v1589 = vld [vmem:[%s1561 + $0x6c] sm:$0xf]
        %v1590 = vld [vmem:[%s1561 + $0x70] sm:$0xf]
        %v1591 = vld [vmem:[%s1561 + $0x74] sm:$0xf]
        %v1592 = vld [vmem:[%s1561 + $0x78] sm:$0xf]
        %v1593 = vld [vmem:[%s1561 + $0x7c] sm:$0xf]
        %v1594 = vld [vmem:[%s1561 + $0x80] sm:$0xf]
        %v1595 = vld [vmem:[%s1561 + $0x84] sm:$0xf]
        %v1596 = vld [vmem:[%s1561 + $0x88] sm:$0xf]
        %v1597 = vld [vmem:[%s1561 + $0x8c] sm:$0xf]
        %v1598 = vld [vmem:[%s1561 + $0x90] sm:$0xf]
        %v1599 = vld [vmem:[%s1561 + $0x94] sm:$0xf]
        %v1600 = vld [vmem:[%s1561 + $0x98] sm:$0xf]
        %v1601 = vld [vmem:[%s1561 + $0x9c] sm:$0xf]
        %v1602 = vld [vmem:[%s1561 + $0xa0] sm:$0xf]
        %v1603 = vld [vmem:[%s1561 + $0xa4] sm:$0xf]
        %v1604 = vld [vmem:[%s1561 + $0xa8] sm:$0xf]
        %v1605 = vld [vmem:[%s1561 + $0xac] sm:$0xf]
        %v1606 = vld [vmem:[%s1561 + $0xb0] sm:$0xf]
        %v1607 = vld [vmem:[%s1561 + $0xb4] sm:$0xf]
        %v1608 = vld [vmem:[%s1561 + $0xb8] sm:$0xf]
        %v1609 = vld [vmem:[%s1561 + $0xbc] sm:$0xf]
        %v1610 = vld [vmem:[%s1561 + $0xc0] sm:$0xf]
        %v1611 = vld [vmem:[%s1561 + $0xc4] sm:$0xf]
        %v1612 = vld [vmem:[%s1561 + $0xc8] sm:$0xf]
        %v1613 = vld [vmem:[%s1561 + $0xcc] sm:$0xf]
        %v1614 = vld [vmem:[%s1561 + $0xd0] sm:$0xf]
        %v1615 = vld [vmem:[%s1561 + $0xd4] sm:$0xf]
        %v1616 = vld [vmem:[%s1561 + $0xd8] sm:$0xf]
        %v1617 = vld [vmem:[%s1561 + $0xdc] sm:$0xf]
        %v1618 = vld [vmem:[%s1561 + $0xe0] sm:$0xf]
        %v1619 = vld [vmem:[%s1561 + $0xe4] sm:$0xf]
        %v1620 = vld [vmem:[%s1561 + $0xe8] sm:$0xf]
        %v1621 = vld [vmem:[%s1561 + $0xec] sm:$0xf]
        %v1622 = vld [vmem:[%s1561 + $0xf0] sm:$0xf]
        %v1623 = vld [vmem:[%s1561 + $0xf4] sm:$0xf]
        %v1624 = vld [vmem:[%s1561 + $0xf8] sm:$0xf]
        %v1625 = vld [vmem:[%s1561 + $0xfc] sm:$0xf]
        %v1690 = vunpack.c.l.b16 %v1562
        %v1691 = vunpack.c.l.b16 %v1563
        %v1692 = vunpack.c.l.b16 %v1564
        %v1693 = vunpack.c.l.b16 %v1565
        %v1694 = vunpack.c.l.b16 %v1566
        %v1695 = vunpack.c.l.b16 %v1567
        %v1696 = vunpack.c.l.b16 %v1568
        %v1697 = vunpack.c.l.b16 %v1569
        %v1698 = vunpack.c.l.b16 %v1570
        %v1699 = vunpack.c.l.b16 %v1571
        %v1700 = vunpack.c.l.b16 %v1572
        %v1701 = vunpack.c.l.b16 %v1573
        %v1702 = vunpack.c.l.b16 %v1574
        %v1703 = vunpack.c.l.b16 %v1575
        %v1704 = vunpack.c.l.b16 %v1576
        %v1705 = vunpack.c.l.b16 %v1577
        %v1706 = vunpack.c.l.b16 %v1578
        %v1707 = vunpack.c.l.b16 %v1579
        %v1708 = vunpack.c.l.b16 %v1580
        %v1709 = vunpack.c.l.b16 %v1581
        %v1710 = vunpack.c.l.b16 %v1582
        %v1711 = vunpack.c.l.b16 %v1583
        %v1712 = vunpack.c.l.b16 %v1584
        %v1713 = vunpack.c.l.b16 %v1585
        %v1714 = vunpack.c.l.b16 %v1586
        %v1715 = vunpack.c.l.b16 %v1587
        %v1716 = vunpack.c.l.b16 %v1588
        %v1717 = vunpack.c.l.b16 %v1589
        %v1718 = vunpack.c.l.b16 %v1590
        %v1719 = vunpack.c.l.b16 %v1591
        %v1720 = vunpack.c.l.b16 %v1592
        %v1721 = vunpack.c.l.b16 %v1593
        %v1722 = vunpack.c.l.b16 %v1594
        %v1723 = vunpack.c.l.b16 %v1595
        %v1724 = vunpack.c.l.b16 %v1596
        %v1725 = vunpack.c.l.b16 %v1597
        %v1726 = vunpack.c.l.b16 %v1598
        %v1727 = vunpack.c.l.b16 %v1599
        %v1728 = vunpack.c.l.b16 %v1600
        %v1729 = vunpack.c.l.b16 %v1601
        %v1730 = vunpack.c.l.b16 %v1602
        %v1731 = vunpack.c.l.b16 %v1603
        %v1732 = vunpack.c.l.b16 %v1604
        %v1733 = vunpack.c.l.b16 %v1605
        %v1734 = vunpack.c.l.b16 %v1606
        %v1735 = vunpack.c.l.b16 %v1607
        %v1736 = vunpack.c.l.b16 %v1608
        %v1737 = vunpack.c.l.b16 %v1609
        %v1738 = vunpack.c.l.b16 %v1610
        %v1739 = vunpack.c.l.b16 %v1611
        %v1740 = vunpack.c.l.b16 %v1612
        %v1741 = vunpack.c.l.b16 %v1613
        %v1742 = vunpack.c.l.b16 %v1614
        %v1743 = vunpack.c.l.b16 %v1615
        %v1744 = vunpack.c.l.b16 %v1616
        %v1745 = vunpack.c.l.b16 %v1617
        %v1746 = vunpack.c.l.b16 %v1618
        %v1747 = vunpack.c.l.b16 %v1619
        %v1748 = vunpack.c.l.b16 %v1620
        %v1749 = vunpack.c.l.b16 %v1621
        %v1750 = vunpack.c.l.b16 %v1622
        %v1751 = vunpack.c.l.b16 %v1623
        %v1752 = vunpack.c.l.b16 %v1624
        %v1753 = vunpack.c.l.b16 %v1625
        %v1754 = vpack.c.b16 %v1691, %v1690
        %v1755 = vpack.c.b16 %v1693, %v1692
        %v1756 = vpack.c.b16 %v1695, %v1694
        %v1757 = vpack.c.b16 %v1697, %v1696
        %v1758 = vpack.c.b16 %v1699, %v1698
        %v1759 = vpack.c.b16 %v1701, %v1700
        %v1760 = vpack.c.b16 %v1703, %v1702
        %v1761 = vpack.c.b16 %v1705, %v1704
        %v1762 = vpack.c.b16 %v1707, %v1706
        %v1763 = vpack.c.b16 %v1709, %v1708
        %v1764 = vpack.c.b16 %v1711, %v1710
        %v1765 = vpack.c.b16 %v1713, %v1712
        %v1766 = vpack.c.b16 %v1715, %v1714
        %v1767 = vpack.c.b16 %v1717, %v1716
        %v1768 = vpack.c.b16 %v1719, %v1718
        %v1769 = vpack.c.b16 %v1721, %v1720
        %v1770 = vpack.c.b16 %v1723, %v1722
        %v1771 = vpack.c.b16 %v1725, %v1724
        %v1772 = vpack.c.b16 %v1727, %v1726
        %v1773 = vpack.c.b16 %v1729, %v1728
        %v1774 = vpack.c.b16 %v1731, %v1730
        %v1775 = vpack.c.b16 %v1733, %v1732
        %v1776 = vpack.c.b16 %v1735, %v1734
        %v1777 = vpack.c.b16 %v1737, %v1736
        %v1778 = vpack.c.b16 %v1739, %v1738
        %v1779 = vpack.c.b16 %v1741, %v1740
        %v1780 = vpack.c.b16 %v1743, %v1742
        %v1781 = vpack.c.b16 %v1745, %v1744
        %v1782 = vpack.c.b16 %v1747, %v1746
        %v1783 = vpack.c.b16 %v1749, %v1748
        %v1784 = vpack.c.b16 %v1751, %v1750
        %v1785 = vpack.c.b16 %v1753, %v1752
        %1818 = vmatprep.subr.bf16.mxu0 0
        %1819 = vmatpush1.bf16.msra.mxu0 %v1761
        %1820 = vmatprep.subr.bf16.mxu0 0
        %1821 = vmatpush1.bf16.msra.mxu0 %v1760
        %1822 = vmatprep.subr.bf16.mxu0 0
        %1823 = vmatpush1.bf16.msra.mxu0 %v1759
        %1824 = vmatprep.subr.bf16.mxu0 0
        %1825 = vmatpush1.bf16.msra.mxu0 %v1758
        %1826 = vmatprep.subr.bf16.mxu0 0
        %1827 = vmatpush1.bf16.msra.mxu0 %v1757
        %1828 = vmatprep.subr.bf16.mxu0 0
        %1829 = vmatpush1.bf16.msra.mxu0 %v1756
        %1830 = vmatprep.subr.bf16.mxu0 0
        %1831 = vmatpush1.bf16.msra.mxu0 %v1755
        %1832 = vmatprep.subr.bf16.mxu0 0
        %1833 = vmatpush1.bf16.msra.mxu0 %v1754
        %1834 = vmatprep.subr.bf16.mxu0 0
        %1835 = vmatpush2.bf16.msra.mxu0 %v1769
        %1836 = vmatprep.subr.bf16.mxu0 0
        %1837 = vmatpush2.bf16.msra.mxu0 %v1768
        %1838 = vmatprep.subr.bf16.mxu0 0
        %1839 = vmatpush2.bf16.msra.mxu0 %v1767
        %1840 = vmatprep.subr.bf16.mxu0 0
        %1841 = vmatpush2.bf16.msra.mxu0 %v1766
        %1842 = vmatprep.subr.bf16.mxu0 0
        %1843 = vmatpush2.bf16.msra.mxu0 %v1765
        %1844 = vmatprep.subr.bf16.mxu0 0
        %1845 = vmatpush2.bf16.msra.mxu0 %v1764
        %1846 = vmatprep.subr.bf16.mxu0 0
        %1847 = vmatpush2.bf16.msra.mxu0 %v1763
        %1848 = vmatprep.subr.bf16.mxu0 0
        %1849 = vmatpush2.bf16.msra.mxu0 %v1762
        %1850 = vmatprep.mubr.bf16.mxu0 %v361
        %1851 = vmatmul.mubr.bf16.gmra.mxu0 %v298
        %v1852 = vpop.f32.mrf.mxu0
        %v1853 = vadd.f32 %v532, %v1852
        %v1854 = vpop.f32.mrf.mxu0
        %v1855 = vpop.f32.mrf.mxu0
        %v1856 = vadd.f32 %v532, %v1855
        %v1857 = vpop.f32.mrf.mxu0
        %1858 = vmatprep.mubr.bf16.mxu0 %v373
        %1859 = vmatmul.mubr.bf16.gmra.mxu0 %v299
        %v1860 = vpop.f32.mrf.mxu0
        %v1861 = vadd.f32 %v532, %v1860
        %v1862 = vpop.f32.mrf.mxu0
        %v1863 = vpop.f32.mrf.mxu0
        %v1864 = vadd.f32 %v532, %v1863
        %v1865 = vpop.f32.mrf.mxu0
        %1866 = vmatprep.mubr.bf16.mxu0 %v385
        %1867 = vmatmul.mubr.bf16.gmra.mxu0 %v300
        %v1868 = vpop.f32.mrf.mxu0
        %v1869 = vadd.f32 %v532, %v1868
        %v1870 = vpop.f32.mrf.mxu0
        %v1871 = vpop.f32.mrf.mxu0
        %v1872 = vadd.f32 %v532, %v1871
        %v1873 = vpop.f32.mrf.mxu0
        %1874 = vmatprep.mubr.bf16.mxu0 %v397
        %1875 = vmatmul.mubr.bf16.gmra.mxu0 %v301
        %v1876 = vpop.f32.mrf.mxu0
        %v1877 = vadd.f32 %v532, %v1876
        %v1878 = vpop.f32.mrf.mxu0
        %v1879 = vpop.f32.mrf.mxu0
        %v1880 = vadd.f32 %v532, %v1879
        %v1881 = vpop.f32.mrf.mxu0
        %1882 = vmatprep.mubr.bf16.mxu0 %v409
        %1883 = vmatmul.mubr.bf16.gmra.mxu0 %v302
        %v1884 = vpop.f32.mrf.mxu0
        %v1885 = vadd.f32 %v532, %v1884
        %v1886 = vpop.f32.mrf.mxu0
        %v1887 = vpop.f32.mrf.mxu0
        %v1888 = vadd.f32 %v532, %v1887
        %v1889 = vpop.f32.mrf.mxu0
        %1890 = vmatprep.mubr.bf16.mxu0 %v421
        %1891 = vmatmul.mubr.bf16.gmra.mxu0 %v303
        %v1892 = vpop.f32.mrf.mxu0
        %v1893 = vadd.f32 %v532, %v1892
        %v1894 = vpop.f32.mrf.mxu0
        %v1895 = vpop.f32.mrf.mxu0
        %v1896 = vadd.f32 %v532, %v1895
        %v1897 = vpop.f32.mrf.mxu0
        %1898 = vmatprep.mubr.bf16.mxu0 %v433
        %1899 = vmatmul.mubr.bf16.gmra.mxu0 %v304
        %v1900 = vpop.f32.mrf.mxu0
        %v1901 = vadd.f32 %v532, %v1900
        %v1902 = vpop.f32.mrf.mxu0
        %v1903 = vpop.f32.mrf.mxu0
        %v1904 = vadd.f32 %v532, %v1903
        %v1905 = vpop.f32.mrf.mxu0
        %1906 = vmatprep.mubr.bf16.mxu0 %v462
        %1907 = vmatmul.mubr.bf16.gmra.mxu0 %v446
        %v1908 = vpop.f32.mrf.mxu0
        %v1909 = vadd.f32 %v532, %v1908
        %v1910 = vpop.f32.mrf.mxu0
        %v1911 = vpop.f32.mrf.mxu0
        %v1912 = vadd.f32 %v532, %v1911
        %v1913 = vpop.f32.mrf.mxu0
        %1914 = vdwg.mxu0
        %1915 = vmatprep.subr.bf16.mxu0 0
        %1916 = vmatpush1.bf16.msra.mxu0 %v1777
        %1917 = vmatprep.subr.bf16.mxu0 0
        %1918 = vmatpush1.bf16.msra.mxu0 %v1776
        %1919 = vmatprep.subr.bf16.mxu0 0
        %1920 = vmatpush1.bf16.msra.mxu0 %v1775
        %1921 = vmatprep.subr.bf16.mxu0 0
        %1922 = vmatpush1.bf16.msra.mxu0 %v1774
        %1923 = vmatprep.subr.bf16.mxu0 0
        %1924 = vmatpush1.bf16.msra.mxu0 %v1773
        %1925 = vmatprep.subr.bf16.mxu0 0
        %1926 = vmatpush1.bf16.msra.mxu0 %v1772
        %1927 = vmatprep.subr.bf16.mxu0 0
        %1928 = vmatpush1.bf16.msra.mxu0 %v1771
        %1929 = vmatprep.subr.bf16.mxu0 0
        %1930 = vmatpush1.bf16.msra.mxu0 %v1770
        %1931 = vmatprep.subr.bf16.mxu0 0
        %1932 = vmatpush2.bf16.msra.mxu0 %v1785
        %1933 = vmatprep.subr.bf16.mxu0 0
        %1934 = vmatpush2.bf16.msra.mxu0 %v1784
        %1935 = vmatprep.subr.bf16.mxu0 0
        %1936 = vmatpush2.bf16.msra.mxu0 %v1783
        %1937 = vmatprep.subr.bf16.mxu0 0
        %1938 = vmatpush2.bf16.msra.mxu0 %v1782
        %1939 = vmatprep.subr.bf16.mxu0 0
        %1940 = vmatpush2.bf16.msra.mxu0 %v1781
        %1941 = vmatprep.subr.bf16.mxu0 0
        %1942 = vmatpush2.bf16.msra.mxu0 %v1780
        %1943 = vmatprep.subr.bf16.mxu0 0
        %1944 = vmatpush2.bf16.msra.mxu0 %v1779
        %1945 = vmatprep.subr.bf16.mxu0 0
        %1946 = vmatpush2.bf16.msra.mxu0 %v1778
        %1947 = vmatprep.mubr.bf16.mxu0 %v373
        %1948 = vmatmul.mubr.bf16.gmra.mxu0 %v299
        %v1949 = vpop.f32.mrf.mxu0
        %v1950 = vadd.f32 %v1853, %v1949
        %v1951 = vpop.f32.mrf.mxu0
        %v1952 = vpop.f32.mrf.mxu0
        %v1953 = vadd.f32 %v1856, %v1952
        %v1954 = vpop.f32.mrf.mxu0
        %1955 = vmatprep.mubr.bf16.mxu0 %v385
        %1956 = vmatmul.mubr.bf16.gmra.mxu0 %v300
        %v1957 = vpop.f32.mrf.mxu0
        %v1958 = vadd.f32 %v1861, %v1957
        %v1959 = vpop.f32.mrf.mxu0
        %v1960 = vpop.f32.mrf.mxu0
        %v1961 = vadd.f32 %v1864, %v1960
        %v1962 = vpop.f32.mrf.mxu0
        %1963 = vmatprep.mubr.bf16.mxu0 %v397
        %1964 = vmatmul.mubr.bf16.gmra.mxu0 %v301
        %v1965 = vpop.f32.mrf.mxu0
        %v1966 = vadd.f32 %v1869, %v1965
        %v1967 = vpop.f32.mrf.mxu0
        %v1968 = vpop.f32.mrf.mxu0
        %v1969 = vadd.f32 %v1872, %v1968
        %v1970 = vpop.f32.mrf.mxu0
        %1971 = vmatprep.mubr.bf16.mxu0 %v409
        %1972 = vmatmul.mubr.bf16.gmra.mxu0 %v302
        %v1973 = vpop.f32.mrf.mxu0
        %v1974 = vadd.f32 %v1877, %v1973
        %v1975 = vpop.f32.mrf.mxu0
        %v1976 = vpop.f32.mrf.mxu0
        %v1977 = vadd.f32 %v1880, %v1976
        %v1978 = vpop.f32.mrf.mxu0
        %1979 = vmatprep.mubr.bf16.mxu0 %v421
        %1980 = vmatmul.mubr.bf16.gmra.mxu0 %v303
        %v1981 = vpop.f32.mrf.mxu0
        %v1982 = vadd.f32 %v1885, %v1981
        %v1983 = vpop.f32.mrf.mxu0
        %v1984 = vpop.f32.mrf.mxu0
        %v1985 = vadd.f32 %v1888, %v1984
        %v1986 = vpop.f32.mrf.mxu0
        %1987 = vmatprep.mubr.bf16.mxu0 %v433
        %1988 = vmatmul.mubr.bf16.gmra.mxu0 %v304
        %v1989 = vpop.f32.mrf.mxu0
        %v1990 = vadd.f32 %v1893, %v1989
        %v1991 = vpop.f32.mrf.mxu0
        %v1992 = vpop.f32.mrf.mxu0
        %v1993 = vadd.f32 %v1896, %v1992
        %v1994 = vpop.f32.mrf.mxu0
        %1995 = vmatprep.mubr.bf16.mxu0 %v462
        %1996 = vmatmul.mubr.bf16.gmra.mxu0 %v446
        %v1997 = vpop.f32.mrf.mxu0
        %v1998 = vadd.f32 %v1901, %v1997
        %v1999 = vpop.f32.mrf.mxu0
        %v2000 = vpop.f32.mrf.mxu0
        %v2001 = vadd.f32 %v1904, %v2000
        %v2002 = vpop.f32.mrf.mxu0
        %2003 = vmatprep.mubr.bf16.mxu0 %v1559
        %2004 = vmatmul.mubr.bf16.gmra.mxu0 %v1543
        %v2005 = vpop.f32.mrf.mxu0
        %v2006 = vadd.f32 %v1909, %v2005
        %v2007 = vpop.f32.mrf.mxu0
        %v2008 = vpop.f32.mrf.mxu0
        %v2009 = vadd.f32 %v1912, %v2008
        %v2010 = vpop.f32.mrf.mxu0
        %2011 = vdwg.mxu0
        %s2012 = scalar_lea.vmem %s219, 256 [#allocation5]
        %2013 = vst [vmem:[%s2012] sm:$0xff] %v1950
        %2014 = vst [vmem:[%s2012 + $0x8] sm:$0xff] %v1953
        %2015 = vst [vmem:[%s2012 + $0x10] sm:$0xff] %v1958
        %2016 = vst [vmem:[%s2012 + $0x18] sm:$0xff] %v1961
        %2017 = vst [vmem:[%s2012 + $0x20] sm:$0xff] %v1966
        %2018 = vst [vmem:[%s2012 + $0x28] sm:$0xff] %v1969
        %2019 = vst [vmem:[%s2012 + $0x30] sm:$0xff] %v1974
        %2020 = vst [vmem:[%s2012 + $0x38] sm:$0xff] %v1977
        %2021 = vst [vmem:[%s2012 + $0x40] sm:$0xff] %v1982
        %2022 = vst [vmem:[%s2012 + $0x48] sm:$0xff] %v1985
        %2023 = vst [vmem:[%s2012 + $0x50] sm:$0xff] %v1990
        %2024 = vst [vmem:[%s2012 + $0x58] sm:$0xff] %v1993
        %2025 = vst [vmem:[%s2012 + $0x60] sm:$0xff] %v1998
        %2026 = vst [vmem:[%s2012 + $0x68] sm:$0xff] %v2001
        %2027 = vst [vmem:[%s2012 + $0x70] sm:$0xff] %v2006
        %2028 = vst [vmem:[%s2012 + $0x78] sm:$0xff] %v2009
        %v2029 = vshrl.u32 %v1547, 16
        %v2032 = vshrl.u32 %v1559, 16
        %v2034 = vshll.u32 %v1559, 16
        %v2036 = vrot.slane %v2034, 1
        %v2037 = vor.u32 %v2032, %v2036
        %v2039 = vshll.u32 %v2029, 16
        %v2041 = vrot.slane %v2039, 1
        %v2042 = vsel %vm337, %v2037, %v2041
        %s2044 = scalar_lea.vmem [#allocation2], 768
        %v2045 = vld [vmem:[%s2044] sm:$0xf]
        %v2046 = vld [vmem:[%s2044 + $0x4] sm:$0xf]
        %v2047 = vld [vmem:[%s2044 + $0x8] sm:$0xf]
        %v2048 = vld [vmem:[%s2044 + $0xc] sm:$0xf]
        %v2049 = vld [vmem:[%s2044 + $0x10] sm:$0xf]
        %v2050 = vld [vmem:[%s2044 + $0x14] sm:$0xf]
        %v2051 = vld [vmem:[%s2044 + $0x18] sm:$0xf]
        %v2052 = vld [vmem:[%s2044 + $0x1c] sm:$0xf]
        %v2053 = vld [vmem:[%s2044 + $0x20] sm:$0xf]
        %v2054 = vld [vmem:[%s2044 + $0x24] sm:$0xf]
        %v2055 = vld [vmem:[%s2044 + $0x28] sm:$0xf]
        %v2056 = vld [vmem:[%s2044 + $0x2c] sm:$0xf]
        %v2057 = vld [vmem:[%s2044 + $0x30] sm:$0xf]
        %v2058 = vld [vmem:[%s2044 + $0x34] sm:$0xf]
        %v2059 = vld [vmem:[%s2044 + $0x38] sm:$0xf]
        %v2060 = vld [vmem:[%s2044 + $0x3c] sm:$0xf]
        %v2061 = vld [vmem:[%s2044 + $0x40] sm:$0xf]
        %v2062 = vld [vmem:[%s2044 + $0x44] sm:$0xf]
        %v2063 = vld [vmem:[%s2044 + $0x48] sm:$0xf]
        %v2064 = vld [vmem:[%s2044 + $0x4c] sm:$0xf]
        %v2065 = vld [vmem:[%s2044 + $0x50] sm:$0xf]
        %v2066 = vld [vmem:[%s2044 + $0x54] sm:$0xf]
        %v2067 = vld [vmem:[%s2044 + $0x58] sm:$0xf]
        %v2068 = vld [vmem:[%s2044 + $0x5c] sm:$0xf]
        %v2069 = vld [vmem:[%s2044 + $0x60] sm:$0xf]
        %v2070 = vld [vmem:[%s2044 + $0x64] sm:$0xf]
        %v2071 = vld [vmem:[%s2044 + $0x68] sm:$0xf]
        %v2072 = vld [vmem:[%s2044 + $0x6c] sm:$0xf]
        %v2073 = vld [vmem:[%s2044 + $0x70] sm:$0xf]
        %v2074 = vld [vmem:[%s2044 + $0x74] sm:$0xf]
        %v2075 = vld [vmem:[%s2044 + $0x78] sm:$0xf]
        %v2076 = vld [vmem:[%s2044 + $0x7c] sm:$0xf]
        %v2077 = vld [vmem:[%s2044 + $0x80] sm:$0xf]
        %v2078 = vld [vmem:[%s2044 + $0x84] sm:$0xf]
        %v2079 = vld [vmem:[%s2044 + $0x88] sm:$0xf]
        %v2080 = vld [vmem:[%s2044 + $0x8c] sm:$0xf]
        %v2081 = vld [vmem:[%s2044 + $0x90] sm:$0xf]
        %v2082 = vld [vmem:[%s2044 + $0x94] sm:$0xf]
        %v2083 = vld [vmem:[%s2044 + $0x98] sm:$0xf]
        %v2084 = vld [vmem:[%s2044 + $0x9c] sm:$0xf]
        %v2085 = vld [vmem:[%s2044 + $0xa0] sm:$0xf]
        %v2086 = vld [vmem:[%s2044 + $0xa4] sm:$0xf]
        %v2087 = vld [vmem:[%s2044 + $0xa8] sm:$0xf]
        %v2088 = vld [vmem:[%s2044 + $0xac] sm:$0xf]
        %v2089 = vld [vmem:[%s2044 + $0xb0] sm:$0xf]
        %v2090 = vld [vmem:[%s2044 + $0xb4] sm:$0xf]
        %v2091 = vld [vmem:[%s2044 + $0xb8] sm:$0xf]
        %v2092 = vld [vmem:[%s2044 + $0xbc] sm:$0xf]
        %v2093 = vld [vmem:[%s2044 + $0xc0] sm:$0xf]
        %v2094 = vld [vmem:[%s2044 + $0xc4] sm:$0xf]
        %v2095 = vld [vmem:[%s2044 + $0xc8] sm:$0xf]
        %v2096 = vld [vmem:[%s2044 + $0xcc] sm:$0xf]
        %v2097 = vld [vmem:[%s2044 + $0xd0] sm:$0xf]
        %v2098 = vld [vmem:[%s2044 + $0xd4] sm:$0xf]
        %v2099 = vld [vmem:[%s2044 + $0xd8] sm:$0xf]
        %v2100 = vld [vmem:[%s2044 + $0xdc] sm:$0xf]
        %v2101 = vld [vmem:[%s2044 + $0xe0] sm:$0xf]
        %v2102 = vld [vmem:[%s2044 + $0xe4] sm:$0xf]
        %v2103 = vld [vmem:[%s2044 + $0xe8] sm:$0xf]
        %v2104 = vld [vmem:[%s2044 + $0xec] sm:$0xf]
        %v2105 = vld [vmem:[%s2044 + $0xf0] sm:$0xf]
        %v2106 = vld [vmem:[%s2044 + $0xf4] sm:$0xf]
        %v2107 = vld [vmem:[%s2044 + $0xf8] sm:$0xf]
        %v2108 = vld [vmem:[%s2044 + $0xfc] sm:$0xf]
        %v2173 = vunpack.c.l.b16 %v2045
        %v2174 = vunpack.c.l.b16 %v2046
        %v2175 = vunpack.c.l.b16 %v2047
        %v2176 = vunpack.c.l.b16 %v2048
        %v2177 = vunpack.c.l.b16 %v2049
        %v2178 = vunpack.c.l.b16 %v2050
        %v2179 = vunpack.c.l.b16 %v2051
        %v2180 = vunpack.c.l.b16 %v2052
        %v2181 = vunpack.c.l.b16 %v2053
        %v2182 = vunpack.c.l.b16 %v2054
        %v2183 = vunpack.c.l.b16 %v2055
        %v2184 = vunpack.c.l.b16 %v2056
        %v2185 = vunpack.c.l.b16 %v2057
        %v2186 = vunpack.c.l.b16 %v2058
        %v2187 = vunpack.c.l.b16 %v2059
        %v2188 = vunpack.c.l.b16 %v2060
        %v2189 = vunpack.c.l.b16 %v2061
        %v2190 = vunpack.c.l.b16 %v2062
        %v2191 = vunpack.c.l.b16 %v2063
        %v2192 = vunpack.c.l.b16 %v2064
        %v2193 = vunpack.c.l.b16 %v2065
        %v2194 = vunpack.c.l.b16 %v2066
        %v2195 = vunpack.c.l.b16 %v2067
        %v2196 = vunpack.c.l.b16 %v2068
        %v2197 = vunpack.c.l.b16 %v2069
        %v2198 = vunpack.c.l.b16 %v2070
        %v2199 = vunpack.c.l.b16 %v2071
        %v2200 = vunpack.c.l.b16 %v2072
        %v2201 = vunpack.c.l.b16 %v2073
        %v2202 = vunpack.c.l.b16 %v2074
        %v2203 = vunpack.c.l.b16 %v2075
        %v2204 = vunpack.c.l.b16 %v2076
        %v2205 = vunpack.c.l.b16 %v2077
        %v2206 = vunpack.c.l.b16 %v2078
        %v2207 = vunpack.c.l.b16 %v2079
        %v2208 = vunpack.c.l.b16 %v2080
        %v2209 = vunpack.c.l.b16 %v2081
        %v2210 = vunpack.c.l.b16 %v2082
        %v2211 = vunpack.c.l.b16 %v2083
        %v2212 = vunpack.c.l.b16 %v2084
        %v2213 = vunpack.c.l.b16 %v2085
        %v2214 = vunpack.c.l.b16 %v2086
        %v2215 = vunpack.c.l.b16 %v2087
        %v2216 = vunpack.c.l.b16 %v2088
        %v2217 = vunpack.c.l.b16 %v2089
        %v2218 = vunpack.c.l.b16 %v2090
        %v2219 = vunpack.c.l.b16 %v2091
        %v2220 = vunpack.c.l.b16 %v2092
        %v2221 = vunpack.c.l.b16 %v2093
        %v2222 = vunpack.c.l.b16 %v2094
        %v2223 = vunpack.c.l.b16 %v2095
        %v2224 = vunpack.c.l.b16 %v2096
        %v2225 = vunpack.c.l.b16 %v2097
        %v2226 = vunpack.c.l.b16 %v2098
        %v2227 = vunpack.c.l.b16 %v2099
        %v2228 = vunpack.c.l.b16 %v2100
        %v2229 = vunpack.c.l.b16 %v2101
        %v2230 = vunpack.c.l.b16 %v2102
        %v2231 = vunpack.c.l.b16 %v2103
        %v2232 = vunpack.c.l.b16 %v2104
        %v2233 = vunpack.c.l.b16 %v2105
        %v2234 = vunpack.c.l.b16 %v2106
        %v2235 = vunpack.c.l.b16 %v2107
        %v2236 = vunpack.c.l.b16 %v2108
        %v2237 = vpack.c.b16 %v2174, %v2173
        %v2238 = vpack.c.b16 %v2176, %v2175
        %v2239 = vpack.c.b16 %v2178, %v2177
        %v2240 = vpack.c.b16 %v2180, %v2179
        %v2241 = vpack.c.b16 %v2182, %v2181
        %v2242 = vpack.c.b16 %v2184, %v2183
        %v2243 = vpack.c.b16 %v2186, %v2185
        %v2244 = vpack.c.b16 %v2188, %v2187
        %v2245 = vpack.c.b16 %v2190, %v2189
        %v2246 = vpack.c.b16 %v2192, %v2191
        %v2247 = vpack.c.b16 %v2194, %v2193
        %v2248 = vpack.c.b16 %v2196, %v2195
        %v2249 = vpack.c.b16 %v2198, %v2197
        %v2250 = vpack.c.b16 %v2200, %v2199
        %v2251 = vpack.c.b16 %v2202, %v2201
        %v2252 = vpack.c.b16 %v2204, %v2203
        %v2253 = vpack.c.b16 %v2206, %v2205
        %v2254 = vpack.c.b16 %v2208, %v2207
        %v2255 = vpack.c.b16 %v2210, %v2209
        %v2256 = vpack.c.b16 %v2212, %v2211
        %v2257 = vpack.c.b16 %v2214, %v2213
        %v2258 = vpack.c.b16 %v2216, %v2215
        %v2259 = vpack.c.b16 %v2218, %v2217
        %v2260 = vpack.c.b16 %v2220, %v2219
        %v2261 = vpack.c.b16 %v2222, %v2221
        %v2262 = vpack.c.b16 %v2224, %v2223
        %v2263 = vpack.c.b16 %v2226, %v2225
        %v2264 = vpack.c.b16 %v2228, %v2227
        %v2265 = vpack.c.b16 %v2230, %v2229
        %v2266 = vpack.c.b16 %v2232, %v2231
        %v2267 = vpack.c.b16 %v2234, %v2233
        %v2268 = vpack.c.b16 %v2236, %v2235
        %2301 = vmatprep.subr.bf16.mxu0 0
        %2302 = vmatpush1.bf16.msra.mxu0 %v2244
        %2303 = vmatprep.subr.bf16.mxu0 0
        %2304 = vmatpush1.bf16.msra.mxu0 %v2243
        %2305 = vmatprep.subr.bf16.mxu0 0
        %2306 = vmatpush1.bf16.msra.mxu0 %v2242
        %2307 = vmatprep.subr.bf16.mxu0 0
        %2308 = vmatpush1.bf16.msra.mxu0 %v2241
        %2309 = vmatprep.subr.bf16.mxu0 0
        %2310 = vmatpush1.bf16.msra.mxu0 %v2240
        %2311 = vmatprep.subr.bf16.mxu0 0
        %2312 = vmatpush1.bf16.msra.mxu0 %v2239
        %2313 = vmatprep.subr.bf16.mxu0 0
        %2314 = vmatpush1.bf16.msra.mxu0 %v2238
        %2315 = vmatprep.subr.bf16.mxu0 0
        %2316 = vmatpush1.bf16.msra.mxu0 %v2237
        %2317 = vmatprep.subr.bf16.mxu0 0
        %2318 = vmatpush2.bf16.msra.mxu0 %v2252
        %2319 = vmatprep.subr.bf16.mxu0 0
        %2320 = vmatpush2.bf16.msra.mxu0 %v2251
        %2321 = vmatprep.subr.bf16.mxu0 0
        %2322 = vmatpush2.bf16.msra.mxu0 %v2250
        %2323 = vmatprep.subr.bf16.mxu0 0
        %2324 = vmatpush2.bf16.msra.mxu0 %v2249
        %2325 = vmatprep.subr.bf16.mxu0 0
        %2326 = vmatpush2.bf16.msra.mxu0 %v2248
        %2327 = vmatprep.subr.bf16.mxu0 0
        %2328 = vmatpush2.bf16.msra.mxu0 %v2247
        %2329 = vmatprep.subr.bf16.mxu0 0
        %2330 = vmatpush2.bf16.msra.mxu0 %v2246
        %2331 = vmatprep.subr.bf16.mxu0 0
        %2332 = vmatpush2.bf16.msra.mxu0 %v2245
        %2333 = vmatprep.mubr.bf16.mxu0 %v977
        %2334 = vmatmul.mubr.bf16.gmra.mxu0 %v361
        %v2335 = vpop.f32.mrf.mxu0
        %v2336 = vadd.f32 %v532, %v2335
        %v2337 = vpop.f32.mrf.mxu0
        %v2338 = vpop.f32.mrf.mxu0
        %v2339 = vadd.f32 %v532, %v2338
        %v2340 = vpop.f32.mrf.mxu0
        %2341 = vmatprep.mubr.bf16.mxu0 %v989
        %2342 = vmatmul.mubr.bf16.gmra.mxu0 %v373
        %v2343 = vpop.f32.mrf.mxu0
        %v2344 = vadd.f32 %v532, %v2343
        %v2345 = vpop.f32.mrf.mxu0
        %v2346 = vpop.f32.mrf.mxu0
        %v2347 = vadd.f32 %v532, %v2346
        %v2348 = vpop.f32.mrf.mxu0
        %2349 = vmatprep.mubr.bf16.mxu0 %v1001
        %2350 = vmatmul.mubr.bf16.gmra.mxu0 %v385
        %v2351 = vpop.f32.mrf.mxu0
        %v2352 = vadd.f32 %v532, %v2351
        %v2353 = vpop.f32.mrf.mxu0
        %v2354 = vpop.f32.mrf.mxu0
        %v2355 = vadd.f32 %v532, %v2354
        %v2356 = vpop.f32.mrf.mxu0
        %2357 = vmatprep.mubr.bf16.mxu0 %v1013
        %2358 = vmatmul.mubr.bf16.gmra.mxu0 %v397
        %v2359 = vpop.f32.mrf.mxu0
        %v2360 = vadd.f32 %v532, %v2359
        %v2361 = vpop.f32.mrf.mxu0
        %v2362 = vpop.f32.mrf.mxu0
        %v2363 = vadd.f32 %v532, %v2362
        %v2364 = vpop.f32.mrf.mxu0
        %2365 = vmatprep.mubr.bf16.mxu0 %v1025
        %2366 = vmatmul.mubr.bf16.gmra.mxu0 %v409
        %v2367 = vpop.f32.mrf.mxu0
        %v2368 = vadd.f32 %v532, %v2367
        %v2369 = vpop.f32.mrf.mxu0
        %v2370 = vpop.f32.mrf.mxu0
        %v2371 = vadd.f32 %v532, %v2370
        %v2372 = vpop.f32.mrf.mxu0
        %2373 = vmatprep.mubr.bf16.mxu0 %v1037
        %2374 = vmatmul.mubr.bf16.gmra.mxu0 %v421
        %v2375 = vpop.f32.mrf.mxu0
        %v2376 = vadd.f32 %v532, %v2375
        %v2377 = vpop.f32.mrf.mxu0
        %v2378 = vpop.f32.mrf.mxu0
        %v2379 = vadd.f32 %v532, %v2378
        %v2380 = vpop.f32.mrf.mxu0
        %2381 = vmatprep.mubr.bf16.mxu0 %v1049
        %2382 = vmatmul.mubr.bf16.gmra.mxu0 %v433
        %v2383 = vpop.f32.mrf.mxu0
        %v2384 = vadd.f32 %v532, %v2383
        %v2385 = vpop.f32.mrf.mxu0
        %v2386 = vpop.f32.mrf.mxu0
        %v2387 = vadd.f32 %v532, %v2386
        %v2388 = vpop.f32.mrf.mxu0
        %2389 = vmatprep.mubr.bf16.mxu0 %v1061
        %2390 = vmatmul.mubr.bf16.gmra.mxu0 %v462
        %v2391 = vpop.f32.mrf.mxu0
        %v2392 = vadd.f32 %v532, %v2391
        %v2393 = vpop.f32.mrf.mxu0
        %v2394 = vpop.f32.mrf.mxu0
        %v2395 = vadd.f32 %v532, %v2394
        %v2396 = vpop.f32.mrf.mxu0
        %2397 = vdwg.mxu0
        %2398 = vmatprep.subr.bf16.mxu0 0
        %2399 = vmatpush1.bf16.msra.mxu0 %v2260
        %2400 = vmatprep.subr.bf16.mxu0 0
        %2401 = vmatpush1.bf16.msra.mxu0 %v2259
        %2402 = vmatprep.subr.bf16.mxu0 0
        %2403 = vmatpush1.bf16.msra.mxu0 %v2258
        %2404 = vmatprep.subr.bf16.mxu0 0
        %2405 = vmatpush1.bf16.msra.mxu0 %v2257
        %2406 = vmatprep.subr.bf16.mxu0 0
        %2407 = vmatpush1.bf16.msra.mxu0 %v2256
        %2408 = vmatprep.subr.bf16.mxu0 0
        %2409 = vmatpush1.bf16.msra.mxu0 %v2255
        %2410 = vmatprep.subr.bf16.mxu0 0
        %2411 = vmatpush1.bf16.msra.mxu0 %v2254
        %2412 = vmatprep.subr.bf16.mxu0 0
        %2413 = vmatpush1.bf16.msra.mxu0 %v2253
        %2414 = vmatprep.subr.bf16.mxu0 0
        %2415 = vmatpush2.bf16.msra.mxu0 %v2268
        %2416 = vmatprep.subr.bf16.mxu0 0
        %2417 = vmatpush2.bf16.msra.mxu0 %v2267
        %2418 = vmatprep.subr.bf16.mxu0 0
        %2419 = vmatpush2.bf16.msra.mxu0 %v2266
        %2420 = vmatprep.subr.bf16.mxu0 0
        %2421 = vmatpush2.bf16.msra.mxu0 %v2265
        %2422 = vmatprep.subr.bf16.mxu0 0
        %2423 = vmatpush2.bf16.msra.mxu0 %v2264
        %2424 = vmatprep.subr.bf16.mxu0 0
        %2425 = vmatpush2.bf16.msra.mxu0 %v2263
        %2426 = vmatprep.subr.bf16.mxu0 0
        %2427 = vmatpush2.bf16.msra.mxu0 %v2262
        %2428 = vmatprep.subr.bf16.mxu0 0
        %2429 = vmatpush2.bf16.msra.mxu0 %v2261
        %2430 = vmatprep.mubr.bf16.mxu0 %v989
        %2431 = vmatmul.mubr.bf16.gmra.mxu0 %v373
        %v2432 = vpop.f32.mrf.mxu0
        %v2433 = vadd.f32 %v2336, %v2432
        %v2434 = vpop.f32.mrf.mxu0
        %v2435 = vpop.f32.mrf.mxu0
        %v2436 = vadd.f32 %v2339, %v2435
        %v2437 = vpop.f32.mrf.mxu0
        %2438 = vmatprep.mubr.bf16.mxu0 %v1001
        %2439 = vmatmul.mubr.bf16.gmra.mxu0 %v385
        %v2440 = vpop.f32.mrf.mxu0
        %v2441 = vadd.f32 %v2344, %v2440
        %v2442 = vpop.f32.mrf.mxu0
        %v2443 = vpop.f32.mrf.mxu0
        %v2444 = vadd.f32 %v2347, %v2443
        %v2445 = vpop.f32.mrf.mxu0
        %2446 = vmatprep.mubr.bf16.mxu0 %v1013
        %2447 = vmatmul.mubr.bf16.gmra.mxu0 %v397
        %v2448 = vpop.f32.mrf.mxu0
        %v2449 = vadd.f32 %v2352, %v2448
        %v2450 = vpop.f32.mrf.mxu0
        %v2451 = vpop.f32.mrf.mxu0
        %v2452 = vadd.f32 %v2355, %v2451
        %v2453 = vpop.f32.mrf.mxu0
        %2454 = vmatprep.mubr.bf16.mxu0 %v1025
        %2455 = vmatmul.mubr.bf16.gmra.mxu0 %v409
        %v2456 = vpop.f32.mrf.mxu0
        %v2457 = vadd.f32 %v2360, %v2456
        %v2458 = vpop.f32.mrf.mxu0
        %v2459 = vpop.f32.mrf.mxu0
        %v2460 = vadd.f32 %v2363, %v2459
        %v2461 = vpop.f32.mrf.mxu0
        %2462 = vmatprep.mubr.bf16.mxu0 %v1037
        %2463 = vmatmul.mubr.bf16.gmra.mxu0 %v421
        %v2464 = vpop.f32.mrf.mxu0
        %v2465 = vadd.f32 %v2368, %v2464
        %v2466 = vpop.f32.mrf.mxu0
        %v2467 = vpop.f32.mrf.mxu0
        %v2468 = vadd.f32 %v2371, %v2467
        %v2469 = vpop.f32.mrf.mxu0
        %2470 = vmatprep.mubr.bf16.mxu0 %v1049
        %2471 = vmatmul.mubr.bf16.gmra.mxu0 %v433
        %v2472 = vpop.f32.mrf.mxu0
        %v2473 = vadd.f32 %v2376, %v2472
        %v2474 = vpop.f32.mrf.mxu0
        %v2475 = vpop.f32.mrf.mxu0
        %v2476 = vadd.f32 %v2379, %v2475
        %v2477 = vpop.f32.mrf.mxu0
        %2478 = vmatprep.mubr.bf16.mxu0 %v1061
        %2479 = vmatmul.mubr.bf16.gmra.mxu0 %v462
        %v2480 = vpop.f32.mrf.mxu0
        %v2481 = vadd.f32 %v2384, %v2480
        %v2482 = vpop.f32.mrf.mxu0
        %v2483 = vpop.f32.mrf.mxu0
        %v2484 = vadd.f32 %v2387, %v2483
        %v2485 = vpop.f32.mrf.mxu0
        %2486 = vmatprep.mubr.bf16.mxu0 %v2042
        %2487 = vmatmul.mubr.bf16.gmra.mxu0 %v1559
        %v2488 = vpop.f32.mrf.mxu0
        %v2489 = vadd.f32 %v2392, %v2488
        %v2490 = vpop.f32.mrf.mxu0
        %v2491 = vpop.f32.mrf.mxu0
        %v2492 = vadd.f32 %v2395, %v2491
        %v2493 = vpop.f32.mrf.mxu0
        %2494 = vdwg.mxu0
        %s2495 = scalar_lea.vmem %s219, 384 [#allocation5]
        %2496 = vst [vmem:[%s2495] sm:$0xff] %v2433
        %2497 = vst [vmem:[%s2495 + $0x8] sm:$0xff] %v2436
        %2498 = vst [vmem:[%s2495 + $0x10] sm:$0xff] %v2441
        %2499 = vst [vmem:[%s2495 + $0x18] sm:$0xff] %v2444
        %2500 = vst [vmem:[%s2495 + $0x20] sm:$0xff] %v2449
        %2501 = vst [vmem:[%s2495 + $0x28] sm:$0xff] %v2452
        %2502 = vst [vmem:[%s2495 + $0x30] sm:$0xff] %v2457
        %2503 = vst [vmem:[%s2495 + $0x38] sm:$0xff] %v2460
        %2504 = vst [vmem:[%s2495 + $0x40] sm:$0xff] %v2465
        %2505 = vst [vmem:[%s2495 + $0x48] sm:$0xff] %v2468
        %2506 = vst [vmem:[%s2495 + $0x50] sm:$0xff] %v2473
        %2507 = vst [vmem:[%s2495 + $0x58] sm:$0xff] %v2476
        %2508 = vst [vmem:[%s2495 + $0x60] sm:$0xff] %v2481
        %2509 = vst [vmem:[%s2495 + $0x68] sm:$0xff] %v2484
        %2510 = vst [vmem:[%s2495 + $0x70] sm:$0xff] %v2489
        %2511 = vst [vmem:[%s2495 + $0x78] sm:$0xff] %v2492
        %s2512 = sand.u32 %s127, 1
        %s2513 = scalar_lea.sflag [#allocation4], %s2512
        %s2514 = sand.u32 %s127, 1
        %s2515 = smul.addr %s2514, 512
        %s2516 = scalar_lea.vmem [#allocation5], %s2515
        // Predicated region
        $region37: #{tpu_custom_call.1} parent=31 // pred_check
          %p2517 = pneg %p137
        $region38: #{tpu_custom_call.1} parent=31 // pred_check_branch
          %2519 = sbr.rel (%p2517) target = $region40
        $region39: #{tpu_custom_call.1} parent=31 // pred_region
          #allocation7 [shape = 'u32[6]{0}', space=smem, size = 0x18, scoped, tag = 'DMA stride descriptor']
          %s2520 = smul.u32 8, %s25
          %s2522 = ssub.s32 8192, 8192
          %2523 = vsyncadd %s2513, %s2522
          %s2524 = smul.addr %s2520, 2
          %s2525 = sadd.s32 %s24, %s2524
          %s2526 = smul.addr %s23, 128
          %s2527 = sadd.s32 %s2525, %s2526
          %s2528 = smul.addr %s2527, 128
          %s2529 = scalar_lea.hbm %s3, %s2528
          %s2531 = sshll.u32 1, 14
          %s2532 = sxor.u32 4294967295, %s2531
          %s2535 = sshll.u32 7, 18
          %s2536 = sxor.u32 4294967295, %s2535
          %s2537 = sand.u32 0, %s2536
          %s2539 = sor.u32 %s2537, 0
          %s2540 = sshll.u32 %s2516, 4
          %s2541 = int_to_ptr.vmem [resolvable:$true] %s2540
          %2547 = sst [smem:[#allocation7]] 2048
          %s2548 = scalar_lea.smem [#allocation7], 1
          %2549 = sst [smem:[%s2548]] 4096
          %s2550 = scalar_lea.smem [#allocation7], 2
          %2551 = sst [smem:[%s2550]] 16
          %s2552 = scalar_lea.smem [#allocation7], 3
          %2553 = sst [smem:[%s2552]] 128
          %s2554 = scalar_lea.smem [#allocation7], 4
          %2555 = sst [smem:[%s2554]] 128
          %s2556 = scalar_lea.smem [#allocation7], 5
          %2557 = sst [smem:[%s2556]] 8
          %2559 = dma.general %s2541, 8192, %s2529, %s2513, 131072, [#allocation7], %s2539, 0
        $region40: #{tpu_custom_call.1} parent=31 // pred_fallthru
          _
      $region32: #{tpu_custom_call.1} parent=5 // pred_fallthru
        _
      %p2560 = scmp.le.s32.totalorder 2, %s13
      // Predicated region
      $region41: #{tpu_custom_call.1} parent=5 // pred_check
        %p2561 = pneg %p2560
      $region42: #{tpu_custom_call.1} parent=5 // pred_check_branch
        %2563 = sbr.rel (%p2561) target = $region44
      $region43: #{tpu_custom_call.1} parent=5 // pred_region
        %s2564 = ssub.s32 %s13, 2
        // Predicated region
        $region45: #{tpu_custom_call.1} parent=43 // pred_check
          %p2565 = pneg %p143
        $region46: #{tpu_custom_call.1} parent=43 // pred_check_branch
          %2567 = sbr.rel (%p2565) target = $region48
        $region47: #{tpu_custom_call.1} parent=43 // pred_region
          %s2568 = sand.u32 %s128, 1
          %s2569 = scalar_lea.sflag [#allocation4], %s2568
          %s2570 = sand.u32 %s128, 1
          %s2571 = smul.addr %s2570, 512
          %s2572 = scalar_lea.vmem [#allocation5], %s2571
          %2573 = dma.done %s2569, 8192
        $region48: #{tpu_custom_call.1} parent=43 // pred_fallthru
          _
      $region44: #{tpu_custom_call.1} parent=5 // pred_fallthru
        _
    $region6: #{tpu_custom_call.1} parent=1 // loop_footer
      %s17 = sadd.s32 1, %s13
    $region7: #{tpu_custom_call.1} parent=1 // loop_footer_branch
      %12 = sbr.rel target = $region3
    $region8: #{tpu_custom_call.1} parent=1 // loop_exit
      _
    %2574 = vsyncpa [#allocation3], 1
    %s2575 = scalar_lea.sflag [#allocation3], 1
    %2576 = vsyncpa %s2575, 1
    %2577 = vsyncpa [#allocation4], 1
    %s2578 = scalar_lea.sflag [#allocation4], 1
    %2579 = vsyncpa %s2578, 1

</llo_original>
